<compile_context>
chip_gen: v5e
topology: v5e:2x2
jax: 0.10.0
libtpu: 0.0.40
codegen_flags: <defaults>
</compile_context>

<pallas_src>
import math
from functools import partial

import jax
import jax.numpy as jnp
from jax.experimental import pallas as pl
from jax.experimental.pallas import tpu as pltpu

HIDDEN = 256          # nn.Linear(latent_dim, 256)
LN_EPS = 1e-5         # nn.LayerNorm default eps
SMOOTHING = 0.1
TEMP_INIT = 0.5
LANE = 128
_INV_SQRT2 = 1.0 / math.sqrt(2.0)
_SQRT_2_OVER_PI = 0.7978845608028654
_NEG_BIG = -1e30      # finite "-inf" for masked (padded) logit columns


def _round_up(n, m):
    return ((n + m - 1) // m) * m


def _vmem_limit_bytes():
    """Generation-aware VMEM limit: ~3/4 of physical capacity (v5e/v6e: 96 MiB of
    128 MiB; v7x: 48 MiB of 64 MiB). Conservative fallback if the query fails."""
    cap = None
    try:
        info = pltpu.get_tpu_info()
        for name in ("vmem_capacity_bytes", "vmem_size_bytes", "vmem_bytes"):
            v = getattr(info, name, None)
            if v:
                cap = int(v)
                break
    except Exception:
        cap = None
    if cap is None:
        cap = 64 * 1024 * 1024  # assume the smallest (v7x) physical VMEM
    return max(min((cap * 3) // 4, 96 * 1024 * 1024), 32 * 1024 * 1024)


def _erf_f32(x):
    """Eigen/XLA-style rational erf approximation for f32 (mul/add/div/clamp only).
    Kept for gelu='erf' (exact PyTorch nn.GELU() parity); VALU-heavy, so not default."""
    x = jnp.clip(x, -4.0, 4.0)
    x2 = x * x
    p = jnp.float32(-2.72614225801306e-10)
    p = p * x2 + jnp.float32(2.77068142495902e-08)
    p = p * x2 + jnp.float32(-2.10102402082508e-06)
    p = p * x2 + jnp.float32(-5.69250639462346e-05)
    p = p * x2 + jnp.float32(-7.34990630326855e-04)
    p = p * x2 + jnp.float32(-2.95459980854025e-03)
    p = p * x2 + jnp.float32(-1.60960333262415e-02)
    p = p * x
    q = jnp.float32(-1.45660718464996e-05)
    q = q * x2 + jnp.float32(-2.13374055278905e-04)
    q = q * x2 + jnp.float32(-1.68282697438203e-03)
    q = q * x2 + jnp.float32(-7.37332916720468e-03)
    q = q * x2 + jnp.float32(-1.42647390514189e-02)
    return p / q


def _gelu(h, kind):
    if kind == "tanh":
        # tanh-form GELU: jnp.tanh routes to the EUP slot (VPU/VALU is the bottleneck
        # here), ~3e-4 max deviation from exact erf-GELU.
        inner = jnp.float32(_SQRT_2_OVER_PI) * (h + jnp.float32(0.044715) * h * h * h)
        return 0.5 * h * (1.0 + jnp.tanh(inner))
    # exact erf-based GELU (PyTorch nn.GELU() default)
    return 0.5 * h * (1.0 + _erf_f32(h * jnp.float32(_INV_SQRT2)))


def _forward_logits(x_ref, w1_ref, b1_ref, g_ref, beta_ref, w2_ref, b2_ref, temp_ref,
                    gelu):
    """Shared per-tile forward: Linear -> LayerNorm -> GELU -> Linear -> /temp."""
    # Linear(latent_dim -> 256). Operands may be bf16 (MXU-native); f32 accumulation.
    h = jnp.dot(x_ref[...], w1_ref[...], preferred_element_type=jnp.float32)
    h = h + b1_ref[...]                                              # (TB, 256) f32
    # LayerNorm(256): biased variance, eps=1e-5, elementwise affine (f32 math)
    mu = jnp.mean(h, axis=-1, keepdims=True)
    c = h - mu
    var = jnp.mean(c * c, axis=-1, keepdims=True)
    hn = c * jax.lax.rsqrt(var + LN_EPS)
    hn = hn * g_ref[...] + beta_ref[...]
    act = _gelu(hn, gelu)
    # TODO(synk): nn.Dropout(p=0.5) is identity in eval/inference mode; omitted
    # (no train-mode PRNG mask plumbing).
    logits = jnp.dot(act.astype(w2_ref.dtype), w2_ref[...],
                     preferred_element_type=jnp.float32)
    logits = logits + b2_ref[...]
    # temperature: single scalar reciprocal from SMEM, broadcast multiply
    inv_temp = 1.0 / temp_ref[0, 0]
    return logits * inv_temp


def _head_kernel(x_ref, w1_ref, b1_ref, g_ref, beta_ref, w2_ref, b2_ref, temp_ref,
                 logits_ref, *, gelu):
    logits = _forward_logits(x_ref, w1_ref, b1_ref, g_ref, beta_ref,
                             w2_ref, b2_ref, temp_ref, gelu)
    logits_ref[...] = logits.astype(logits_ref.dtype)


def _head_loss_kernel(x_ref, w1_ref, b1_ref, g_ref, beta_ref, w2_ref, b2_ref, temp_ref,
                      labels_ref, loss_ref, *, num_classes, padded_classes, smoothing,
                      gelu):
    # fused forward + label-smoothed CE; logits never leave VMEM/vregs.
    logits = _forward_logits(x_ref, w1_ref, b1_ref, g_ref, beta_ref,
                             w2_ref, b2_ref, temp_ref, gelu)          # (TB, C_pad) f32
    col = jax.lax.broadcasted_iota(jnp.int32, logits.shape, 1)
    padded = padded_classes != num_classes                            # static Python bool
    if padded:
        valid = col < num_classes
        logits = jnp.where(valid, logits, jnp.float32(_NEG_BIG))      # mask padded cols
    m = jnp.max(logits, axis=-1, keepdims=True)
    z = logits - m
    lse = jnp.log(jnp.sum(jnp.exp(z), axis=-1, keepdims=True))
    logp = z - lse                                                    # log_softmax
    # NLL via select-sum (no float one-hot materialization / extra multiply).
    nll = -jnp.sum(jnp.where(col == labels_ref[...], logp, 0.0),
                   axis=-1, keepdims=True)
    logp_valid = jnp.where(valid, logp, 0.0) if padded else logp
    smooth = -jnp.sum(logp_valid, axis=-1, keepdims=True) / jnp.float32(num_classes)
    loss_ref[...] = (1.0 - smoothing) * nll + smoothing * smooth


def _weight_specs(latent_dim, c_pad, single_buffer):
    """Constant-index_map weight blocks (VMEM resident). single_buffer=True requests
    one pipeline buffer instead of the default two (halves resident weight VMEM)."""
    kwargs = {"pipeline_mode": pl.Buffered(1)} if single_buffer else {}

    def const(shape):
        return pl.BlockSpec(shape, lambda i: (0,) * len(shape), **kwargs)

    return [
        const((latent_dim, HIDDEN)),                        # w1
        const((1, HIDDEN)),                                 # b1
        const((1, HIDDEN)),                                 # gamma
        const((1, HIDDEN)),                                 # beta
        const((HIDDEN, c_pad)),                             # w2
        const((1, c_pad)),                                  # b2
        pl.BlockSpec(memory_space=pltpu.MemorySpace.SMEM),  # temperature scalar
    ]


def enhanced_head_forward(x, params, targets=None, smoothing=SMOOTHING,
                          matmul_dtype=jnp.bfloat16, block_b=512,
                          gelu="tanh", logits_dtype=None):
    B, D = x.shape
    C = params["w2"].shape[1]
    C_pad = _round_up(C, LANE)                       # lane-dense logits / MXU N-dim

    itemsize = jnp.dtype(matmul_dtype).itemsize
    out_dtype = jnp.dtype(matmul_dtype) if logits_dtype is None else jnp.dtype(logits_dtype)
    if targets is not None:
        out_dtype = jnp.dtype(jnp.float32)           # per-example losses are f32
    out_itemsize = out_dtype.itemsize

    # Batch tiling: bf16 rows pack 2 per sublane -> align tiles to 16 rows; for
    # moderate B make sure there are >=2 grid steps so v7x can use both TensorCores.
    row_align = 8 if itemsize == 4 else 16
    if B <= 256:
        TB = _round_up(B, row_align)                 # single tile
    elif B <= 2 * block_b:
        TB = _round_up((B + 1) // 2, row_align)      # exactly 2 tiles (megacore)
    else:
        TB = block_b

    # VMEM budget: auto-shrink TB if needed, then hard-assert before launch.
    def _vmem_estimate(tb):
        weight_bytes = ((D * HIDDEN + HIDDEN * C_pad) * itemsize
                        + (3 * HIDDEN + C_pad) * 4)
        total = 2 * weight_bytes                     # worst case: 2 pipeline buffers
        total += 2 * tb * D * itemsize               # x tile, double-buffered
        if targets is None:
            total += 2 * tb * C_pad * out_itemsize   # logits tile, double-buffered
        else:
            total += 2 * tb * 4 * 2                  # labels in + loss out tiles
            total += 2 * tb * C_pad * 4              # in-kernel f32 logits/softmax temps
        return total

    vmem_limit = _vmem_limit_bytes()
    while _vmem_estimate(TB) > (2 * vmem_limit) // 3 and TB > row_align:
        TB = max(row_align, _round_up(TB // 2, row_align))
    assert _vmem_estimate(TB) <= vmem_limit, (
        f"VMEM budget exceeded even at TB={TB} "
        f"({_vmem_estimate(TB)} > {vmem_limit} bytes); num_classes={C} too large "
        f"for un-tiled class dimension.")
    # TODO(synk): class-dimension grid tiling with an online logsumexp accumulator for
    # very large num_classes (hard VMEM wall on v7x's 64 MiB otherwise).

    B_pad = _round_up(B, TB)
    grid = (B_pad // TB,)

    x_p = x.astype(matmul_dtype)
    if B_pad != B:
        x_p = jnp.pad(x_p, ((0, B_pad - B), (0, 0)))
    w1 = params["w1"].astype(matmul_dtype)
    w2, b2 = params["w2"], params["b2"]
    if C_pad != C:
        w2 = jnp.pad(w2, ((0, 0), (0, C_pad - C)))
        b2 = jnp.pad(b2, ((0, 0), (0, C_pad - C)))
    w2 = w2.astype(matmul_dtype)

    x_spec = pl.BlockSpec((TB, D), lambda i: (i, 0))
    compiler_params = pltpu.CompilerParams(
        dimension_semantics=("parallel",),           # batch tiles independent (v7x 2 TCs)
        vmem_limit_bytes=int(vmem_limit),
    )

    flops = 2 * B_pad * (D * HIDDEN + HIDDEN * C_pad)
    weight_bytes_ce = (D * HIDDEN + HIDDEN * C_pad) * itemsize + (3 * HIDDEN + C_pad + 1) * 4
    x_bytes = B_pad * D * itemsize
    trans_base = B_pad * (HIDDEN + 1) if gelu == "tanh" else B_pad

    operands = (x_p, w1, params["b1"], params["gamma"], params["beta"], w2, b2,
                params["temp"])

    def launch(single_buffer):
        w_specs = _weight_specs(D, C_pad, single_buffer)
        if targets is None:
            cost = pl.CostEstimate(
                flops=flops, transcendentals=int(trans_base),
                bytes_accessed=int(x_bytes + weight_bytes_ce + B_pad * C_pad * out_itemsize))
            return pl.pallas_call(
                partial(_head_kernel, gelu=gelu),
                out_shape=jax.ShapeDtypeStruct((B_pad, C_pad), out_dtype),
                grid=grid,
                in_specs=[x_spec] + w_specs,
                out_specs=pl.BlockSpec((TB, C_pad), lambda i: (i, 0)),
                compiler_params=compiler_params,
                cost_estimate=cost,
            )(*operands)
        labels = targets.reshape(B, 1).astype(jnp.int32)
        if B_pad != B:
            labels = jnp.pad(labels, ((0, B_pad - B), (0, 0)))
        cost = pl.CostEstimate(
            flops=flops, transcendentals=int(trans_base + B_pad * (C_pad + 1)),
            bytes_accessed=int(x_bytes + weight_bytes_ce + 2 * B_pad * 4))
        return pl.pallas_call(
            partial(_head_loss_kernel, num_classes=C, padded_classes=C_pad,
                    smoothing=smoothing, gelu=gelu),
            out_shape=jax.ShapeDtypeStruct((B_pad, 1), jnp.float32),
            grid=grid,
            in_specs=[x_spec] + w_specs + [pl.BlockSpec((TB, 1), lambda i: (i, 0))],
            out_specs=pl.BlockSpec((TB, 1), lambda i: (i, 0)),
            compiler_params=compiler_params,
            cost_estimate=cost,
        )(*operands, labels)

    try:
        out = launch(single_buffer=True)
    except Exception:
        # pl.Buffered(1) on constant weight blocks not supported by this jax version:
        # fall back to default (double) buffering — identical numerics.
        out = launch(single_buffer=False)

    if targets is None:
        return out[:B, :C]
    return jnp.mean(out[:B, 0])


def init_params(key, latent_dim, num_classes):
    k1, k2, k3 = jax.random.split(key, 3)
    return dict(
        w1=jax.random.normal(k1, (latent_dim, HIDDEN), jnp.float32)
           * (1.0 / math.sqrt(latent_dim)),
        b1=jnp.zeros((1, HIDDEN), jnp.float32),
        gamma=jnp.ones((1, HIDDEN), jnp.float32),
        beta=jnp.zeros((1, HIDDEN), jnp.float32),
        w2=jax.random.normal(k2, (HIDDEN, num_classes), jnp.float32)
           * (1.0 / math.sqrt(HIDDEN)),
        b2=jax.random.normal(k3, (1, num_classes), jnp.float32) * 0.01,
        temp=jnp.full((1, 1), TEMP_INIT, jnp.float32),
    )


def reference_forward(x, params, targets=None, smoothing=SMOOTHING, gelu="erf"):
    h = x @ params["w1"] + params["b1"]
    mu = jnp.mean(h, axis=-1, keepdims=True)
    var = jnp.mean((h - mu) ** 2, axis=-1, keepdims=True)
    hn = (h - mu) / jnp.sqrt(var + LN_EPS)
    hn = hn * params["gamma"] + params["beta"]
    act = jax.nn.gelu(hn, approximate=(gelu == "tanh"))
    logits = (act @ params["w2"] + params["b2"]) / params["temp"][0, 0]
    if targets is None:
        return logits
    logp = jax.nn.log_softmax(logits, axis=-1)
    nll = -jnp.take_along_axis(logp, targets[:, None], axis=-1)[:, 0]
    smooth = -jnp.mean(logp, axis=-1)
    return jnp.mean((1.0 - smoothing) * nll + smoothing * smooth)


if __name__ == "__main__":
    B, LATENT_DIM, NUM_CLASSES = 8, 32, 10
    key = jax.random.PRNGKey(0)
    kx, kt, kp, kx2, kt2 = jax.random.split(key, 5)

    x = jax.random.normal(kx, (B, LATENT_DIM), jnp.float32)
    targets = jax.random.randint(kt, (B,), 0, NUM_CLASSES, dtype=jnp.int32)
    params = init_params(kp, LATENT_DIM, NUM_CLASSES)

    ref_logits = reference_forward(x, params)                    # exact-GELU reference
    ref_loss = reference_forward(x, params, targets)

    # 1) f32 matmuls + exact erf GELU: strict parity with the PyTorch module.
    logits_exact = jax.block_until_ready(
        enhanced_head_forward(x, params, matmul_dtype=jnp.float32, gelu="erf"))
    loss_exact = jax.block_until_ready(
        enhanced_head_forward(x, params, targets, matmul_dtype=jnp.float32, gelu="erf"))
    assert logits_exact.shape == (B, NUM_CLASSES)
    assert jnp.allclose(logits_exact, ref_logits, atol=1e-3, rtol=1e-3), "f32/erf logits mismatch"
    assert jnp.allclose(loss_exact, ref_loss, atol=1e-3, rtol=1e-3), "f32/erf loss mismatch"

    # 2) default perf path: bf16 MXU operands, tanh-GELU (EUP slot), bf16 logits out.
    logits_fast = jax.block_until_ready(enhanced_head_forward(x, params))
    loss_fast = jax.block_until_ready(enhanced_head_forward(x, params, targets))
    assert logits_fast.shape == (B, NUM_CLASSES)
    assert logits_fast.dtype == jnp.bfloat16
    assert jnp.allclose(logits_fast.astype(jnp.float32), ref_logits,
                        atol=5e-2, rtol=5e-2), "bf16 logits mismatch"
    assert jnp.allclose(loss_fast, ref_loss, atol=5e-2, rtol=5e-2), "bf16 loss mismatch"

    # 3) multi-tile grid (B=300 -> 2 batch tiles + padded rows), f32/tanh, checked
    #    against a tanh-GELU reference at tight tolerance (validates tiling/masking).
    B2 = 300
    x2 = jax.random.normal(kx2, (B2, LATENT_DIM), jnp.float32)
    t2 = jax.random.randint(kt2, (B2,), 0, NUM_CLASSES, dtype=jnp.int32)
    ref2_logits = reference_forward(x2, params, gelu="tanh")
    ref2_loss = reference_forward(x2, params, t2, gelu="tanh")
    logits2 = jax.block_until_ready(
        enhanced_head_forward(x2, params, matmul_dtype=jnp.float32, gelu="tanh"))
    loss2 = jax.block_until_ready(
        enhanced_head_forward(x2, params, t2, matmul_dtype=jnp.float32, gelu="tanh"))
    assert logits2.shape == (B2, NUM_CLASSES)
    assert jnp.allclose(logits2, ref2_logits, atol=1e-3, rtol=1e-3), "multi-tile logits mismatch"
    assert jnp.allclose(loss2, ref2_loss, atol=1e-3, rtol=1e-3), "multi-tile loss mismatch"

    print("KERNEL_OK")
</pallas_src>

<mosaic_0001>
module attributes {stable_mosaic.version = 11 : i64} {
  func.func @_head_kernel(%arg0: i32, %arg1: memref<8x32xf32, #tpu.memory_space<vmem>>, %arg2: memref<32x256xf32, #tpu.memory_space<vmem>>, %arg3: memref<1x256xf32, #tpu.memory_space<vmem>>, %arg4: memref<1x256xf32, #tpu.memory_space<vmem>>, %arg5: memref<1x256xf32, #tpu.memory_space<vmem>>, %arg6: memref<256x128xf32, #tpu.memory_space<vmem>>, %arg7: memref<1x128xf32, #tpu.memory_space<vmem>>, %arg8: memref<1x1xf32, #tpu.memory_space<smem>>, %arg9: memref<8x128xf32, #tpu.memory_space<vmem>>) attributes {dimension_semantics = [#tpu.dimension_semantics<parallel>], iteration_bounds = array<i64: 1>, scalar_prefetch = 0 : i64, scratch_operands = 0 : i64, tpu.core_type = #tpu.core_type<tc>, window_params = [{transform_indices = @transform_0, window_bounds = array<i64: 8, 32>}, {pipeline_mode = #tpu.pipeline_mode<synchronous>, transform_indices = @transform_1, window_bounds = array<i64: 32, 256>}, {pipeline_mode = #tpu.pipeline_mode<synchronous>, transform_indices = @transform_2, window_bounds = array<i64: 1, 256>}, {pipeline_mode = #tpu.pipeline_mode<synchronous>, transform_indices = @transform_3, window_bounds = array<i64: 1, 256>}, {pipeline_mode = #tpu.pipeline_mode<synchronous>, transform_indices = @transform_4, window_bounds = array<i64: 1, 256>}, {pipeline_mode = #tpu.pipeline_mode<synchronous>, transform_indices = @transform_5, window_bounds = array<i64: 256, 128>}, {pipeline_mode = #tpu.pipeline_mode<synchronous>, transform_indices = @transform_6, window_bounds = array<i64: 1, 128>}, {transform_indices = @transform_7, window_bounds = array<i64: 1, 1>}, {transform_indices = @transform_8, window_bounds = array<i64: 8, 128>}]} {
    %c0 = arith.constant 0 : index
    %c0_0 = arith.constant 0 : index
    %0 = vector.load %arg1[%c0, %c0_0] : memref<8x32xf32, #tpu.memory_space<vmem>>, vector<8x32xf32>
    %c0_1 = arith.constant 0 : index
    %c0_2 = arith.constant 0 : index
    %1 = vector.load %arg2[%c0_1, %c0_2] : memref<32x256xf32, #tpu.memory_space<vmem>>, vector<32x256xf32>
    %cst = arith.constant dense<0.000000e+00> : vector<8x256xf32>
    %2 = tpu.matmul %0, %1, %cst {dimension_numbers = #tpu.dot_dimension_numbers<[1], [0], [0], [1], [0, 0, 1, 1], [], []>} : vector<8x32xf32>, vector<32x256xf32>, vector<8x256xf32> -> vector<8x256xf32>
    %c0_3 = arith.constant 0 : index
    %c0_4 = arith.constant 0 : index
    %3 = vector.load %arg3[%c0_3, %c0_4] : memref<1x256xf32, #tpu.memory_space<vmem>>, vector<1x256xf32>
    %4 = vector.broadcast %3 : vector<1x256xf32> to vector<8x256xf32>
    %5 = arith.addf %2, %4 : vector<8x256xf32>
    %cst_5 = arith.constant dense<0.000000e+00> : vector<8xf32>
    %6 = vector.multi_reduction <add>, %5, %cst_5 [1] : vector<8x256xf32> to vector<8xf32>
    %7 = vector.shape_cast %6 : vector<8xf32> to vector<8x1xf32>
    %cst_6 = arith.constant 2.560000e+02 : f32
    %8 = vector.broadcast %cst_6 : f32 to vector<8x1xf32>
    %9 = arith.divf %7, %8 : vector<8x1xf32>
    %10 = vector.broadcast %9 : vector<8x1xf32> to vector<8x256xf32>
    %11 = arith.subf %5, %10 : vector<8x256xf32>
    %12 = arith.mulf %11, %11 : vector<8x256xf32>
    %cst_7 = arith.constant dense<0.000000e+00> : vector<8xf32>
    %13 = vector.multi_reduction <add>, %12, %cst_7 [1] : vector<8x256xf32> to vector<8xf32>
    %14 = vector.shape_cast %13 : vector<8xf32> to vector<8x1xf32>
    %cst_8 = arith.constant 2.560000e+02 : f32
    %15 = vector.broadcast %cst_8 : f32 to vector<8x1xf32>
    %16 = arith.divf %14, %15 : vector<8x1xf32>
    %cst_9 = arith.constant 9.99999974E-6 : f32
    %17 = vector.broadcast %cst_9 : f32 to vector<8x1xf32>
    %18 = arith.addf %16, %17 : vector<8x1xf32>
    %19 = math.rsqrt %18 : vector<8x1xf32>
    %20 = vector.broadcast %19 : vector<8x1xf32> to vector<8x256xf32>
    %21 = arith.mulf %11, %20 : vector<8x256xf32>
    %c0_10 = arith.constant 0 : index
    %c0_11 = arith.constant 0 : index
    %22 = vector.load %arg4[%c0_10, %c0_11] : memref<1x256xf32, #tpu.memory_space<vmem>>, vector<1x256xf32>
    %23 = vector.broadcast %22 : vector<1x256xf32> to vector<8x256xf32>
    %24 = arith.mulf %21, %23 : vector<8x256xf32>
    %c0_12 = arith.constant 0 : index
    %c0_13 = arith.constant 0 : index
    %25 = vector.load %arg5[%c0_12, %c0_13] : memref<1x256xf32, #tpu.memory_space<vmem>>, vector<1x256xf32>
    %26 = vector.broadcast %25 : vector<1x256xf32> to vector<8x256xf32>
    %27 = arith.addf %24, %26 : vector<8x256xf32>
    %cst_14 = arith.constant 5.000000e-01 : f32
    %28 = vector.broadcast %cst_14 : f32 to vector<8x256xf32>
    %29 = arith.mulf %28, %27 : vector<8x256xf32>
    %cst_15 = arith.constant 0.707106769 : f32
    %30 = vector.broadcast %cst_15 : f32 to vector<8x256xf32>
    %31 = arith.mulf %27, %30 : vector<8x256xf32>
    %cst_16 = arith.constant -4.000000e+00 : f32
    %cst_17 = arith.constant 4.000000e+00 : f32
    %32 = vector.broadcast %cst_16 : f32 to vector<8x256xf32>
    %33 = arith.maximumf %32, %31 : vector<8x256xf32>
    %34 = vector.broadcast %cst_17 : f32 to vector<8x256xf32>
    %35 = arith.minimumf %34, %33 : vector<8x256xf32>
    %36 = arith.mulf %35, %35 : vector<8x256xf32>
    %cst_18 = arith.constant -2.72614237E-10 : f32
    %37 = vector.broadcast %cst_18 : f32 to vector<8x256xf32>
    %38 = arith.mulf %37, %36 : vector<8x256xf32>
    %cst_19 = arith.constant 2.77068146E-8 : f32
    %39 = vector.broadcast %cst_19 : f32 to vector<8x256xf32>
    %40 = arith.addf %38, %39 : vector<8x256xf32>
    %41 = arith.mulf %40, %36 : vector<8x256xf32>
    %cst_20 = arith.constant -2.10102394E-6 : f32
    %42 = vector.broadcast %cst_20 : f32 to vector<8x256xf32>
    %43 = arith.addf %41, %42 : vector<8x256xf32>
    %44 = arith.mulf %43, %36 : vector<8x256xf32>
    %cst_21 = arith.constant -5.69250624E-5 : f32
    %45 = vector.broadcast %cst_21 : f32 to vector<8x256xf32>
    %46 = arith.addf %44, %45 : vector<8x256xf32>
    %47 = arith.mulf %46, %36 : vector<8x256xf32>
    %cst_22 = arith.constant -7.34990637E-4 : f32
    %48 = vector.broadcast %cst_22 : f32 to vector<8x256xf32>
    %49 = arith.addf %47, %48 : vector<8x256xf32>
    %50 = arith.mulf %49, %36 : vector<8x256xf32>
    %cst_23 = arith.constant -2.954600e-03 : f32
    %51 = vector.broadcast %cst_23 : f32 to vector<8x256xf32>
    %52 = arith.addf %50, %51 : vector<8x256xf32>
    %53 = arith.mulf %52, %36 : vector<8x256xf32>
    %cst_24 = arith.constant -0.0160960332 : f32
    %54 = vector.broadcast %cst_24 : f32 to vector<8x256xf32>
    %55 = arith.addf %53, %54 : vector<8x256xf32>
    %56 = arith.mulf %55, %35 : vector<8x256xf32>
    %cst_25 = arith.constant -1.45660715E-5 : f32
    %57 = vector.broadcast %cst_25 : f32 to vector<8x256xf32>
    %58 = arith.mulf %57, %36 : vector<8x256xf32>
    %cst_26 = arith.constant -2.13374049E-4 : f32
    %59 = vector.broadcast %cst_26 : f32 to vector<8x256xf32>
    %60 = arith.addf %58, %59 : vector<8x256xf32>
    %61 = arith.mulf %60, %36 : vector<8x256xf32>
    %cst_27 = arith.constant -0.00168282702 : f32
    %62 = vector.broadcast %cst_27 : f32 to vector<8x256xf32>
    %63 = arith.addf %61, %62 : vector<8x256xf32>
    %64 = arith.mulf %63, %36 : vector<8x256xf32>
    %cst_28 = arith.constant -0.00737332925 : f32
    %65 = vector.broadcast %cst_28 : f32 to vector<8x256xf32>
    %66 = arith.addf %64, %65 : vector<8x256xf32>
    %67 = arith.mulf %66, %36 : vector<8x256xf32>
    %cst_29 = arith.constant -0.0142647391 : f32
    %68 = vector.broadcast %cst_29 : f32 to vector<8x256xf32>
    %69 = arith.addf %67, %68 : vector<8x256xf32>
    %70 = arith.divf %56, %69 : vector<8x256xf32>
    %cst_30 = arith.constant 1.000000e+00 : f32
    %71 = vector.broadcast %cst_30 : f32 to vector<8x256xf32>
    %72 = arith.addf %71, %70 : vector<8x256xf32>
    %73 = arith.mulf %29, %72 : vector<8x256xf32>
    %c0_31 = arith.constant 0 : index
    %c0_32 = arith.constant 0 : index
    %74 = vector.load %arg6[%c0_31, %c0_32] : memref<256x128xf32, #tpu.memory_space<vmem>>, vector<256x128xf32>
    %cst_33 = arith.constant dense<0.000000e+00> : vector<8x128xf32>
    %75 = tpu.matmul %73, %74, %cst_33 {dimension_numbers = #tpu.dot_dimension_numbers<[1], [0], [0], [1], [0, 0, 1, 1], [], []>} : vector<8x256xf32>, vector<256x128xf32>, vector<8x128xf32> -> vector<8x128xf32>
    %c0_34 = arith.constant 0 : index
    %c0_35 = arith.constant 0 : index
    %76 = vector.load %arg7[%c0_34, %c0_35] : memref<1x128xf32, #tpu.memory_space<vmem>>, vector<1x128xf32>
    %77 = vector.broadcast %76 : vector<1x128xf32> to vector<8x128xf32>
    %78 = arith.addf %75, %77 : vector<8x128xf32>
    %c0_36 = arith.constant 0 : index
    %c0_37 = arith.constant 0 : index
    %79 = memref.load %arg8[%c0_36, %c0_37] : memref<1x1xf32, #tpu.memory_space<smem>>
    %cst_38 = arith.constant 1.000000e+00 : f32
    %80 = arith.divf %cst_38, %79 : f32
    %81 = vector.broadcast %80 : f32 to vector<8x128xf32>
    %82 = arith.mulf %78, %81 : vector<8x128xf32>
    %c0_39 = arith.constant 0 : index
    %c0_40 = arith.constant 0 : index
    %83 = vector.load %arg9[%c0_39, %c0_40] : memref<8x128xf32, #tpu.memory_space<vmem>>, vector<8x128xf32>
    tpu.vector_store %arg9[%c0_39, %c0_40], %82 {strides = array<i32>} : memref<8x128xf32, #tpu.memory_space<vmem>>, vector<8x128xf32>,
    return
  }
  func.func @transform_0(%arg0: i32) -> (i32, i32) {
    %c0_i32 = arith.constant 0 : i32
    %c0_i32_0 = arith.constant 0 : i32
    return %arg0, %c0_i32 : i32, i32
  }
  func.func @transform_1(%arg0: i32) -> (i32, i32) {
    %c0_i32 = arith.constant 0 : i32
    %c0_i32_0 = arith.constant 0 : i32
    %c0_i32_1 = arith.constant 0 : i32
    return %c0_i32, %c0_i32_0 : i32, i32
  }
  func.func @transform_2(%arg0: i32) -> (i32, i32) {
    %c0_i32 = arith.constant 0 : i32
    %c0_i32_0 = arith.constant 0 : i32
    %c0_i32_1 = arith.constant 0 : i32
    return %c0_i32, %c0_i32_0 : i32, i32
  }
  func.func @transform_3(%arg0: i32) -> (i32, i32) {
    %c0_i32 = arith.constant 0 : i32
    %c0_i32_0 = arith.constant 0 : i32
    %c0_i32_1 = arith.constant 0 : i32
    return %c0_i32, %c0_i32_0 : i32, i32
  }
  func.func @transform_4(%arg0: i32) -> (i32, i32) {
    %c0_i32 = arith.constant 0 : i32
    %c0_i32_0 = arith.constant 0 : i32
    %c0_i32_1 = arith.constant 0 : i32
    return %c0_i32, %c0_i32_0 : i32, i32
  }
  func.func @transform_5(%arg0: i32) -> (i32, i32) {
    %c0_i32 = arith.constant 0 : i32
    %c0_i32_0 = arith.constant 0 : i32
    %c0_i32_1 = arith.constant 0 : i32
    return %c0_i32, %c0_i32_0 : i32, i32
  }
  func.func @transform_6(%arg0: i32) -> (i32, i32) {
    %c0_i32 = arith.constant 0 : i32
    %c0_i32_0 = arith.constant 0 : i32
    %c0_i32_1 = arith.constant 0 : i32
    return %c0_i32, %c0_i32_0 : i32, i32
  }
  func.func @transform_7(%arg0: i32) -> (i32, i32) {
    %c0_i32 = arith.constant 0 : i32
    %c0_i32_0 = arith.constant 0 : i32
    %c0_i32_1 = arith.constant 0 : i32
    return %c0_i32, %c0_i32_0 : i32, i32
  }
  func.func @transform_8(%arg0: i32) -> (i32, i32) {
    %c0_i32 = arith.constant 0 : i32
    %c0_i32_0 = arith.constant 0 : i32
    return %arg0, %c0_i32 : i32, i32
  }
}

module attributes {stable_mosaic.version = 11 : i64} {
  func.func @_head_kernel(%arg0: i32, %arg1: memref<8x32xf32, #tpu.memory_space<vmem>>, %arg2: memref<32x256xf32, #tpu.memory_space<vmem>>, %arg3: memref<1x256xf32, #tpu.memory_space<vmem>>, %arg4: memref<1x256xf32, #tpu.memory_space<vmem>>, %arg5: memref<1x256xf32, #tpu.memory_space<vmem>>, %arg6: memref<256x128xf32, #tpu.memory_space<vmem>>, %arg7: memref<1x128xf32, #tpu.memory_space<vmem>>, %arg8: memref<1x1xf32, #tpu.memory_space<smem>>, %arg9: memref<8x128xf32, #tpu.memory_space<vmem>>) attributes {dimension_semantics = [#tpu.dimension_semantics<parallel>], iteration_bounds = array<i64: 1>, scalar_prefetch = 0 : i64, scratch_operands = 0 : i64, tpu.core_type = #tpu.core_type<tc>, window_params = [{transform_indices = @transform_0, window_bounds = array<i64: 8, 32>}, {pipeline_mode = #tpu.pipeline_mode<synchronous>, transform_indices = @transform_1, window_bounds = array<i64: 32, 256>}, {pipeline_mode = #tpu.pipeline_mode<synchronous>, transform_indices = @transform_2, window_bounds = array<i64: 1, 256>}, {pipeline_mode = #tpu.pipeline_mode<synchronous>, transform_indices = @transform_3, window_bounds = array<i64: 1, 256>}, {pipeline_mode = #tpu.pipeline_mode<synchronous>, transform_indices = @transform_4, window_bounds = array<i64: 1, 256>}, {pipeline_mode = #tpu.pipeline_mode<synchronous>, transform_indices = @transform_5, window_bounds = array<i64: 256, 128>}, {pipeline_mode = #tpu.pipeline_mode<synchronous>, transform_indices = @transform_6, window_bounds = array<i64: 1, 128>}, {transform_indices = @transform_7, window_bounds = array<i64: 1, 1>}, {transform_indices = @transform_8, window_bounds = array<i64: 8, 128>}]} {
    %c0 = arith.constant 0 : index
    %c0_0 = arith.constant 0 : index
    %0 = vector.load %arg1[%c0, %c0_0] : memref<8x32xf32, #tpu.memory_space<vmem>>, vector<8x32xf32>
    %c0_1 = arith.constant 0 : index
    %c0_2 = arith.constant 0 : index
    %1 = vector.load %arg2[%c0_1, %c0_2] : memref<32x256xf32, #tpu.memory_space<vmem>>, vector<32x256xf32>
    %cst = arith.constant dense<0.000000e+00> : vector<8x256xf32>
    %2 = tpu.matmul %0, %1, %cst {dimension_numbers = #tpu.dot_dimension_numbers<[1], [0], [0], [1], [0, 0, 1, 1], [], []>} : vector<8x32xf32>, vector<32x256xf32>, vector<8x256xf32> -> vector<8x256xf32>
    %c0_3 = arith.constant 0 : index
    %c0_4 = arith.constant 0 : index
    %3 = vector.load %arg3[%c0_3, %c0_4] : memref<1x256xf32, #tpu.memory_space<vmem>>, vector<1x256xf32>
    %4 = vector.broadcast %3 : vector<1x256xf32> to vector<8x256xf32>
    %5 = arith.addf %2, %4 : vector<8x256xf32>
    %cst_5 = arith.constant dense<0.000000e+00> : vector<8xf32>
    %6 = vector.multi_reduction <add>, %5, %cst_5 [1] : vector<8x256xf32> to vector<8xf32>
    %7 = vector.shape_cast %6 : vector<8xf32> to vector<8x1xf32>
    %cst_6 = arith.constant 2.560000e+02 : f32
    %8 = vector.broadcast %cst_6 : f32 to vector<8x1xf32>
    %9 = arith.divf %7, %8 : vector<8x1xf32>
    %10 = vector.broadcast %9 : vector<8x1xf32> to vector<8x256xf32>
    %11 = arith.subf %5, %10 : vector<8x256xf32>
    %12 = arith.mulf %11, %11 : vector<8x256xf32>
    %cst_7 = arith.constant dense<0.000000e+00> : vector<8xf32>
    %13 = vector.multi_reduction <add>, %12, %cst_7 [1] : vector<8x256xf32> to vector<8xf32>
    %14 = vector.shape_cast %13 : vector<8xf32> to vector<8x1xf32>
    %cst_8 = arith.constant 2.560000e+02 : f32
    %15 = vector.broadcast %cst_8 : f32 to vector<8x1xf32>
    %16 = arith.divf %14, %15 : vector<8x1xf32>
    %cst_9 = arith.constant 9.99999974E-6 : f32
    %17 = vector.broadcast %cst_9 : f32 to vector<8x1xf32>
    %18 = arith.addf %16, %17 : vector<8x1xf32>
    %19 = math.rsqrt %18 : vector<8x1xf32>
    %20 = vector.broadcast %19 : vector<8x1xf32> to vector<8x256xf32>
    %21 = arith.mulf %11, %20 : vector<8x256xf32>
    %c0_10 = arith.constant 0 : index
    %c0_11 = arith.constant 0 : index
    %22 = vector.load %arg4[%c0_10, %c0_11] : memref<1x256xf32, #tpu.memory_space<vmem>>, vector<1x256xf32>
    %23 = vector.broadcast %22 : vector<1x256xf32> to vector<8x256xf32>
    %24 = arith.mulf %21, %23 : vector<8x256xf32>
    %c0_12 = arith.constant 0 : index
    %c0_13 = arith.constant 0 : index
    %25 = vector.load %arg5[%c0_12, %c0_13] : memref<1x256xf32, #tpu.memory_space<vmem>>, vector<1x256xf32>
    %26 = vector.broadcast %25 : vector<1x256xf32> to vector<8x256xf32>
    %27 = arith.addf %24, %26 : vector<8x256xf32>
    %cst_14 = arith.constant 5.000000e-01 : f32
    %28 = vector.broadcast %cst_14 : f32 to vector<8x256xf32>
    %29 = arith.mulf %28, %27 : vector<8x256xf32>
    %cst_15 = arith.constant 0.707106769 : f32
    %30 = vector.broadcast %cst_15 : f32 to vector<8x256xf32>
    %31 = arith.mulf %27, %30 : vector<8x256xf32>
    %cst_16 = arith.constant -4.000000e+00 : f32
    %cst_17 = arith.constant 4.000000e+00 : f32
    %32 = vector.broadcast %cst_16 : f32 to vector<8x256xf32>
    %33 = arith.maximumf %32, %31 : vector<8x256xf32>
    %34 = vector.broadcast %cst_17 : f32 to vector<8x256xf32>
    %35 = arith.minimumf %34, %33 : vector<8x256xf32>
    %36 = arith.mulf %35, %35 : vector<8x256xf32>
    %cst_18 = arith.constant -2.72614237E-10 : f32
    %37 = vector.broadcast %cst_18 : f32 to vector<8x256xf32>
    %38 = arith.mulf %37, %36 : vector<8x256xf32>
    %cst_19 = arith.constant 2.77068146E-8 : f32
    %39 = vector.broadcast %cst_19 : f32 to vector<8x256xf32>
    %40 = arith.addf %38, %39 : vector<8x256xf32>
    %41 = arith.mulf %40, %36 : vector<8x256xf32>
    %cst_20 = arith.constant -2.10102394E-6 : f32
    %42 = vector.broadcast %cst_20 : f32 to vector<8x256xf32>
    %43 = arith.addf %41, %42 : vector<8x256xf32>
    %44 = arith.mulf %43, %36 : vector<8x256xf32>
    %cst_21 = arith.constant -5.69250624E-5 : f32
    %45 = vector.broadcast %cst_21 : f32 to vector<8x256xf32>
    %46 = arith.addf %44, %45 : vector<8x256xf32>
    %47 = arith.mulf %46, %36 : vector<8x256xf32>
    %cst_22 = arith.constant -7.34990637E-4 : f32
    %48 = vector.broadcast %cst_22 : f32 to vector<8x256xf32>
    %49 = arith.addf %47, %48 : vector<8x256xf32>
    %50 = arith.mulf %49, %36 : vector<8x256xf32>
    %cst_23 = arith.constant -2.954600e-03 : f32
    %51 = vector.broadcast %cst_23 : f32 to vector<8x256xf32>
    %52 = arith.addf %50, %51 : vector<8x256xf32>
    %53 = arith.mulf %52, %36 : vector<8x256xf32>
    %cst_24 = arith.constant -0.0160960332 : f32
    %54 = vector.broadcast %cst_24 : f32 to vector<8x256xf32>
    %55 = arith.addf %53, %54 : vector<8x256xf32>
    %56 = arith.mulf %55, %35 : vector<8x256xf32>
    %cst_25 = arith.constant -1.45660715E-5 : f32
    %57 = vector.broadcast %cst_25 : f32 to vector<8x256xf32>
    %58 = arith.mulf %57, %36 : vector<8x256xf32>
    %cst_26 = arith.constant -2.13374049E-4 : f32
    %59 = vector.broadcast %cst_26 : f32 to vector<8x256xf32>
    %60 = arith.addf %58, %59 : vector<8x256xf32>
    %61 = arith.mulf %60, %36 : vector<8x256xf32>
    %cst_27 = arith.constant -0.00168282702 : f32
    %62 = vector.broadcast %cst_27 : f32 to vector<8x256xf32>
    %63 = arith.addf %61, %62 : vector<8x256xf32>
    %64 = arith.mulf %63, %36 : vector<8x256xf32>
    %cst_28 = arith.constant -0.00737332925 : f32
    %65 = vector.broadcast %cst_28 : f32 to vector<8x256xf32>
    %66 = arith.addf %64, %65 : vector<8x256xf32>
    %67 = arith.mulf %66, %36 : vector<8x256xf32>
    %cst_29 = arith.constant -0.0142647391 : f32
    %68 = vector.broadcast %cst_29 : f32 to vector<8x256xf32>
    %69 = arith.addf %67, %68 : vector<8x256xf32>
    %70 = arith.divf %56, %69 : vector<8x256xf32>
    %cst_30 = arith.constant 1.000000e+00 : f32
    %71 = vector.broadcast %cst_30 : f32 to vector<8x256xf32>
    %72 = arith.addf %71, %70 : vector<8x256xf32>
    %73 = arith.mulf %29, %72 : vector<8x256xf32>
    %c0_31 = arith.constant 0 : index
    %c0_32 = arith.constant 0 : index
    %74 = vector.load %arg6[%c0_31, %c0_32] : memref<256x128xf32, #tpu.memory_space<vmem>>, vector<256x128xf32>
    %cst_33 = arith.constant dense<0.000000e+00> : vector<8x128xf32>
    %75 = tpu.matmul %73, %74, %cst_33 {dimension_numbers = #tpu.dot_dimension_numbers<[1], [0], [0], [1], [0, 0, 1, 1], [], []>} : vector<8x256xf32>, vector<256x128xf32>, vector<8x128xf32> -> vector<8x128xf32>
    %c0_34 = arith.constant 0 : index
    %c0_35 = arith.constant 0 : index
    %76 = vector.load %arg7[%c0_34, %c0_35] : memref<1x128xf32, #tpu.memory_space<vmem>>, vector<1x128xf32>
    %77 = vector.broadcast %76 : vector<1x128xf32> to vector<8x128xf32>
    %78 = arith.addf %75, %77 : vector<8x128xf32>
    %c0_36 = arith.constant 0 : index
    %c0_37 = arith.constant 0 : index
    %79 = memref.load %arg8[%c0_36, %c0_37] : memref<1x1xf32, #tpu.memory_space<smem>>
    %cst_38 = arith.constant 1.000000e+00 : f32
    %80 = arith.divf %cst_38, %79 : f32
    %81 = vector.broadcast %80 : f32 to vector<8x128xf32>
    %82 = arith.mulf %78, %81 : vector<8x128xf32>
    %c0_39 = arith.constant 0 : index
    %c0_40 = arith.constant 0 : index
    %83 = vector.load %arg9[%c0_39, %c0_40] : memref<8x128xf32, #tpu.memory_space<vmem>>, vector<8x128xf32>
    tpu.vector_store %arg9[%c0_39, %c0_40], %82 {strides = array<i32>} : memref<8x128xf32, #tpu.memory_space<vmem>>, vector<8x128xf32>,
    return
  }
  func.func @transform_0(%arg0: i32) -> (i32, i32) {
    %c0_i32 = arith.constant 0 : i32
    %c0_i32_0 = arith.constant 0 : i32
    return %arg0, %c0_i32 : i32, i32
  }
  func.func @transform_1(%arg0: i32) -> (i32, i32) {
    %c0_i32 = arith.constant 0 : i32
    %c0_i32_0 = arith.constant 0 : i32
    %c0_i32_1 = arith.constant 0 : i32
    return %c0_i32, %c0_i32_0 : i32, i32
  }
  func.func @transform_2(%arg0: i32) -> (i32, i32) {
    %c0_i32 = arith.constant 0 : i32
    %c0_i32_0 = arith.constant 0 : i32
    %c0_i32_1 = arith.constant 0 : i32
    return %c0_i32, %c0_i32_0 : i32, i32
  }
  func.func @transform_3(%arg0: i32) -> (i32, i32) {
    %c0_i32 = arith.constant 0 : i32
    %c0_i32_0 = arith.constant 0 : i32
    %c0_i32_1 = arith.constant 0 : i32
    return %c0_i32, %c0_i32_0 : i32, i32
  }
  func.func @transform_4(%arg0: i32) -> (i32, i32) {
    %c0_i32 = arith.constant 0 : i32
    %c0_i32_0 = arith.constant 0 : i32
    %c0_i32_1 = arith.constant 0 : i32
    return %c0_i32, %c0_i32_0 : i32, i32
  }
  func.func @transform_5(%arg0: i32) -> (i32, i32) {
    %c0_i32 = arith.constant 0 : i32
    %c0_i32_0 = arith.constant 0 : i32
    %c0_i32_1 = arith.constant 0 : i32
    return %c0_i32, %c0_i32_0 : i32, i32
  }
  func.func @transform_6(%arg0: i32) -> (i32, i32) {
    %c0_i32 = arith.constant 0 : i32
    %c0_i32_0 = arith.constant 0 : i32
    %c0_i32_1 = arith.constant 0 : i32
    return %c0_i32, %c0_i32_0 : i32, i32
  }
  func.func @transform_7(%arg0: i32) -> (i32, i32) {
    %c0_i32 = arith.constant 0 : i32
    %c0_i32_0 = arith.constant 0 : i32
    %c0_i32_1 = arith.constant 0 : i32
    return %c0_i32, %c0_i32_0 : i32, i32
  }
  func.func @transform_8(%arg0: i32) -> (i32, i32) {
    %c0_i32 = arith.constant 0 : i32
    %c0_i32_0 = arith.constant 0 : i32
    return %arg0, %c0_i32 : i32, i32
  }
}

</mosaic_0001>

<llo_original>
// kernel: tpu_custom_call.1
$region0: #{tpu_custom_call.1}
  #allocation0 [shape = 'u32[]', space=smem, size = 0x4, offset = 0x4, fixed_abs, tag = 'smem constant byte address 0x4 - core index']
  #allocation1 [shape = 'u32[72,128]{1,0:T(1,128)}', space=vmem, size = 0x9000, scoped, tag = 'internal scratch']
  #allocation2 [shape = 'f32[1,1]{1,0:T(1,128)S(6)}', space=smem, size = 0x200, scoped, tag = 'scoped memory for tpu_custom_call.1']
  %s0 = inlined_call_operand.hbm [shape: f32[8,32], index: 0, kind: input, shape index: {}]
  %s1 = inlined_call_operand.hbm [shape: f32[32,256], index: 1, kind: input, shape index: {}]
  %s2 = inlined_call_operand.vmem [shape: f32[1,256], index: 2, kind: input, shape index: {}]
  %s3 = inlined_call_operand.vmem [shape: f32[1,256], index: 3, kind: input, shape index: {}]
  %s4 = inlined_call_operand.hbm [shape: f32[1,256], index: 4, kind: input, shape index: {}]
  %s5 = inlined_call_operand.hbm [shape: f32[256,128], index: 5, kind: input, shape index: {}]
  %s6 = inlined_call_operand.vmem [shape: f32[1,128], index: 6, kind: input, shape index: {}]
  %s7 = inlined_call_operand.<no memory space> [shape: f32[1,1], index: 7, kind: input, shape index: {}]
  %s8 = inlined_call_operand.hbm [shape: f32[8,128], index: 8, kind: output, shape index: {}]
  %s9 = sld [smem:[#allocation0]]
  $region58: #{tpu_custom_call.1} parent=0
    _
  %s11 = ssub.s32 1, %s9
  %s12 = scalar_select 0, %s11, %s9
  %13 = sst [smem:[#allocation2]] %s7
  $region1: #{tpu_custom_call.1} parent=0
    #allocation3 [shape = 'u8[4096]{0}', space=vmem, size = 0x1000, scoped, tag = 'input window, operand 0, single buffered']
    #allocation4 [shape = 's32[1]{0}', space=sflag, size = 0x4, scoped, tag = 'scoped memory for tpu_custom_call.1']
    #allocation5 [shape = 's32[1]{0}', space=sflag, size = 0x4, scoped, tag = 'scoped memory for tpu_custom_call.1']
    #allocation6 [shape = 'u8[32768]{0}', space=vmem, size = 0x8000, scoped, tag = 'input window, operand 1, single buffered']
    #allocation7 [shape = 's32[1]{0}', space=sflag, size = 0x4, scoped, tag = 'scoped memory for tpu_custom_call.1']
    #allocation8 [shape = 'u8[1024]{0}', space=vmem, size = 0x400, scoped, tag = 'input window, operand 4, single buffered']
    #allocation9 [shape = 'u8[131072]{0}', space=vmem, size = 0x20000, scoped, tag = 'input window, operand 5, single buffered']
    #allocation10 [shape = 's32[1]{0}', space=sflag, size = 0x4, scoped, tag = 'scoped memory for tpu_custom_call.1']
    #allocation11 [shape = 'u8[4096]{0}', space=vmem, size = 0x1000, scoped, tag = 'output window, operand 0, single buffered']
    %14 = vsyncpa [#allocation4], 0
    %15 = vsyncpa [#allocation7], 0
    %16 = vsyncpa [#allocation10], 0
    %17 = vsyncpa [#allocation5], 0
    // Predicated region
    $region2: #{tpu_custom_call.1} parent=1 // pred_check
      _
    $region3: #{tpu_custom_call.1} parent=1 // pred_check_branch
      %19 = sbr.rel (0) target = $region5
    $region4: #{tpu_custom_call.1} parent=1 // pred_region
      %21 = vsyncadd [#allocation4], 0
      %s23 = sshll.u32 %s0, 4
      %s24 = int_to_ptr.hbm [resolvable:$true] %s23
      %s25 = sshll.u32 [#allocation3], 4
      %s26 = int_to_ptr.vmem [resolvable:$true] %s25
      %28 = dma.hbm_to_vmem [thread:$0]  %s24, 128, %s26, [#allocation4]
    $region5: #{tpu_custom_call.1} parent=1 // pred_fallthru
      _
    // Predicated region
    $region6: #{tpu_custom_call.1} parent=1 // pred_check
      _
    $region7: #{tpu_custom_call.1} parent=1 // pred_check_branch
      %30 = sbr.rel (0) target = $region9
    $region8: #{tpu_custom_call.1} parent=1 // pred_region
      %32 = vsyncadd [#allocation7], 0
      %s33 = sshll.u32 %s1, 4
      %s34 = int_to_ptr.hbm [resolvable:$true] %s33
      %s35 = sshll.u32 [#allocation6], 4
      %s36 = int_to_ptr.vmem [resolvable:$true] %s35
      %41 = dma.hbm_to_vmem [thread:$0]  %s34, 1024, %s36, [#allocation7], 256, 256, 16
    $region9: #{tpu_custom_call.1} parent=1 // pred_fallthru
      _
    // Predicated region
    $region10: #{tpu_custom_call.1} parent=1 // pred_check
      _
    $region11: #{tpu_custom_call.1} parent=1 // pred_check_branch
      %43 = sbr.rel (0) target = $region13
    $region12: #{tpu_custom_call.1} parent=1 // pred_region
      _
    $region13: #{tpu_custom_call.1} parent=1 // pred_fallthru
      _
    // Predicated region
    $region14: #{tpu_custom_call.1} parent=1 // pred_check
      _
    $region15: #{tpu_custom_call.1} parent=1 // pred_check_branch
      %45 = sbr.rel (0) target = $region17
    $region16: #{tpu_custom_call.1} parent=1 // pred_region
      _
    $region17: #{tpu_custom_call.1} parent=1 // pred_fallthru
      _
    // Predicated region
    $region18: #{tpu_custom_call.1} parent=1 // pred_check
      _
    $region19: #{tpu_custom_call.1} parent=1 // pred_check_branch
      %47 = sbr.rel (0) target = $region21
    $region20: #{tpu_custom_call.1} parent=1 // pred_region
      %49 = vsyncadd [#allocation7], 0
      %s51 = sshll.u32 %s4, 4
      %s52 = int_to_ptr.hbm [resolvable:$true] %s51
      %s53 = sshll.u32 [#allocation8], 4
      %s54 = int_to_ptr.vmem [resolvable:$true] %s53
      %56 = dma.hbm_to_vmem [thread:$0]  %s52, 32, %s54, [#allocation7]
    $region21: #{tpu_custom_call.1} parent=1 // pred_fallthru
      _
    // Predicated region
    $region22: #{tpu_custom_call.1} parent=1 // pred_check
      _
    $region23: #{tpu_custom_call.1} parent=1 // pred_check_branch
      %58 = sbr.rel (0) target = $region25
    $region24: #{tpu_custom_call.1} parent=1 // pred_region
      %60 = vsyncadd [#allocation10], 0
      %s61 = sshll.u32 %s5, 4
      %s62 = int_to_ptr.hbm [resolvable:$true] %s61
      %s63 = sshll.u32 [#allocation9], 4
      %s64 = int_to_ptr.vmem [resolvable:$true] %s63
      %69 = dma.hbm_to_vmem [thread:$0]  %s62, 4096, %s64, [#allocation10], 128, 128, 8
    $region25: #{tpu_custom_call.1} parent=1 // pred_fallthru
      _
    // Predicated region
    $region26: #{tpu_custom_call.1} parent=1 // pred_check
      _
    $region27: #{tpu_custom_call.1} parent=1 // pred_check_branch
      %71 = sbr.rel (0) target = $region29
    $region28: #{tpu_custom_call.1} parent=1 // pred_region
      _
    $region29: #{tpu_custom_call.1} parent=1 // pred_fallthru
      _
    // Predicated region
    $region30: #{tpu_custom_call.1} parent=1 // pred_check
      _
    $region31: #{tpu_custom_call.1} parent=1 // pred_check_branch
      %73 = sbr.rel (0) target = $region33
    $region32: #{tpu_custom_call.1} parent=1 // pred_region
      _
    $region33: #{tpu_custom_call.1} parent=1 // pred_fallthru
      _
    // Predicated region
    $region34: #{tpu_custom_call.1} parent=1 // pred_check
      _
    $region35: #{tpu_custom_call.1} parent=1 // pred_check_branch
      %75 = sbr.rel (0) target = $region37
    $region36: #{tpu_custom_call.1} parent=1 // pred_region
      %77 = dma.done [#allocation4], 128
    $region37: #{tpu_custom_call.1} parent=1 // pred_fallthru
      _
    // Predicated region
    $region38: #{tpu_custom_call.1} parent=1 // pred_check
      _
    $region39: #{tpu_custom_call.1} parent=1 // pred_check_branch
      %79 = sbr.rel (0) target = $region41
    $region40: #{tpu_custom_call.1} parent=1 // pred_region
      %81 = dma.done [#allocation7], 1024
    $region41: #{tpu_custom_call.1} parent=1 // pred_fallthru
      _
    // Predicated region
    $region42: #{tpu_custom_call.1} parent=1 // pred_check
      _
    $region43: #{tpu_custom_call.1} parent=1 // pred_check_branch
      %83 = sbr.rel (0) target = $region45
    $region44: #{tpu_custom_call.1} parent=1 // pred_region
      %85 = dma.done [#allocation7], 32
    $region45: #{tpu_custom_call.1} parent=1 // pred_fallthru
      _
    // Predicated region
    $region46: #{tpu_custom_call.1} parent=1 // pred_check
      _
    $region47: #{tpu_custom_call.1} parent=1 // pred_check_branch
      %87 = sbr.rel (0) target = $region49
    $region48: #{tpu_custom_call.1} parent=1 // pred_region
      %89 = dma.done [#allocation10], 4096
    $region49: #{tpu_custom_call.1} parent=1 // pred_fallthru
      _
    %v90 = vld [vmem:[#allocation3] sm:$0xff]
    %v91 = vld [vmem:[#allocation6] sm:$0xff]
    %v92 = vld [vmem:[#allocation6 + $0x8] sm:$0xff]
    %v93 = vld [vmem:[#allocation6 + $0x10] sm:$0xff]
    %v94 = vld [vmem:[#allocation6 + $0x18] sm:$0xff]
    %v95 = vld [vmem:[#allocation6 + $0x20] sm:$0xff]
    %v96 = vld [vmem:[#allocation6 + $0x28] sm:$0xff]
    %v97 = vld [vmem:[#allocation6 + $0x30] sm:$0xff]
    %v98 = vld [vmem:[#allocation6 + $0x38] sm:$0xff]
    %v99 = vld [vmem:[%s2] sm:$0x3]
    %v101 = vperm.slane %v99, 0
    %v102 = vperm.slane %v99, 1
    %vm105 = vcmask 261120
    %v107 = vsel %vm105, %v90, 0
    %109 = vmatpush.msra.mxu0 0.0
    %110 = vmatpush.msra.mxu0 0.0
    %111 = vmatpush.msra.mxu0 0.0
    %112 = vmatpush.msra.mxu0 0.0
    %113 = vmatpush.msra.mxu0 0.0
    %114 = vmatpush.msra.mxu0 0.0
    %115 = vmatpush.msra.mxu0 0.0
    %116 = vmatpush.msra.mxu0 0.0
    %117 = vmatpush.msra.mxu0 0.0
    %118 = vmatpush.msra.mxu0 0.0
    %119 = vmatpush.msra.mxu0 0.0
    %120 = vmatpush.msra.mxu0 0.0
    %121 = vmatpush.msra.mxu0 %v97
    %122 = vmatpush.msra.mxu0 %v95
    %123 = vmatpush.msra.mxu0 %v93
    %124 = vmatpush.msra.mxu0 %v91
    %125 = vmatmul.f32.gmra.mxu0 %v107
    %v126 = vpop.f32.mrf.mxu0
    %v127 = vadd.f32 %v101, %v126
    %128 = vdwg.mxu0
    %129 = vmatpush.msra.mxu0 0.0
    %130 = vmatpush.msra.mxu0 0.0
    %131 = vmatpush.msra.mxu0 0.0
    %132 = vmatpush.msra.mxu0 0.0
    %133 = vmatpush.msra.mxu0 0.0
    %134 = vmatpush.msra.mxu0 0.0
    %135 = vmatpush.msra.mxu0 0.0
    %136 = vmatpush.msra.mxu0 0.0
    %137 = vmatpush.msra.mxu0 0.0
    %138 = vmatpush.msra.mxu0 0.0
    %139 = vmatpush.msra.mxu0 0.0
    %140 = vmatpush.msra.mxu0 0.0
    %141 = vmatpush.msra.mxu0 %v98
    %142 = vmatpush.msra.mxu0 %v96
    %143 = vmatpush.msra.mxu0 %v94
    %144 = vmatpush.msra.mxu0 %v92
    %145 = vmatmul.f32.gmra.mxu0 %v107
    %v146 = vpop.f32.mrf.mxu0
    %v147 = vadd.f32 %v102, %v146
    %148 = vdwg.mxu0
    %v149 = vadd.f32 %v127, %v147
    %150 = vadd.xlane.f32.xlu0 %v149
    %v151 = vpop.xlane.xlu0 %150
    %v152 = vrcp.pop 256.0
    %v153 = vmul.f32 256.0, %v152
    %v154 = vsub.f32 1.0, %v153
    %v155 = vmul.f32 %v152, %v154
    %v156 = vadd.f32 %v152, %v155
    %vm157 = vweird.f32 %v152
    %v158 = vsel %vm157, %v152, %v156
    %v159 = vmul.f32 %v151, %v158
    %v160 = vsub.f32 %v127, %v159
    %v161 = vsub.f32 %v147, %v159
    %v162 = vmul.f32 %v160, %v160
    %v163 = vmul.f32 %v161, %v161
    %v164 = vadd.f32 %v162, %v163
    %165 = vadd.xlane.f32.xlu0 %v164
    %v166 = vpop.xlane.xlu0 %165
    %v167 = vmul.f32 %v166, %v158
    %v168 = vadd.f32 %v167, 1e-05
    %v169 = vrsqrt.pop %v168
    %v170 = vmul.f32 %v169, %v168
    %v171 = vmul.f32 %v170, %v169
    %v172 = vmul.f32 0.5, %v171
    %v173 = vsub.f32 1.5, %v172
    %v174 = vmul.f32 %v169, %v173
    %vm175 = vweird.f32 %v168
    %vm176 = vweird.f32 %v169
    %vm177 = vmor %vm175, %vm176
    %v178 = vsel %vm177, %v169, %v174
    %v179 = vmul.f32 %v160, %v178
    %v180 = vmul.f32 %v161, %v178
    %v181 = vld [vmem:[%s3] sm:$0x3]
    %v183 = vperm.slane %v181, 0
    %v184 = vperm.slane %v181, 1
    %v187 = vmul.f32 %v179, %v183
    %v188 = vmul.f32 %v180, %v184
    %v189 = vld [vmem:[#allocation8] sm:$0x3]
    %v191 = vperm.slane %v189, 0
    %v192 = vperm.slane %v189, 1
    %v195 = vadd.f32 %v187, %v191
    %v196 = vadd.f32 %v188, %v192
    %v197 = vmul.f32 %v195, 0.5
    %v198 = vmul.f32 %v196, 0.5
    %v199 = vmul.f32 %v195, 0.70710677
    %v200 = vmul.f32 %v196, 0.70710677
    %v201 = vmax.f32 %v199, -4.0
    %v202 = vmax.f32 %v200, -4.0
    %v203 = vmin.f32 %v201, 4.0
    %v204 = vmin.f32 %v202, 4.0
    %v205 = vmul.f32 %v203, %v203
    %v206 = vmul.f32 %v204, %v204
    %v207 = vmul.f32 %v205, -2.7261424e-10
    %v208 = vmul.f32 %v206, -2.7261424e-10
    %v209 = vadd.f32 %v207, 2.7706815e-08
    %v210 = vadd.f32 %v208, 2.7706815e-08
    %v211 = vmul.f32 %v209, %v205
    %v212 = vmul.f32 %v210, %v206
    %v213 = vadd.f32 %v211, -2.101024e-06
    %v214 = vadd.f32 %v212, -2.101024e-06
    %v215 = vmul.f32 %v213, %v205
    %v216 = vmul.f32 %v214, %v206
    %v217 = vadd.f32 %v215, -5.6925062e-05
    %v218 = vadd.f32 %v216, -5.6925062e-05
    %v219 = vmul.f32 %v217, %v205
    %v220 = vmul.f32 %v218, %v206
    %v221 = vadd.f32 %v219, -0.00073499064
    %v222 = vadd.f32 %v220, -0.00073499064
    %v223 = vmul.f32 %v221, %v205
    %v224 = vmul.f32 %v222, %v206
    %v225 = vadd.f32 %v223, -0.0029546
    %v226 = vadd.f32 %v224, -0.0029546
    %v227 = vmul.f32 %v225, %v205
    %v228 = vmul.f32 %v226, %v206
    %v229 = vadd.f32 %v227, -0.016096033
    %v230 = vadd.f32 %v228, -0.016096033
    %v231 = vmul.f32 %v229, %v203
    %v232 = vmul.f32 %v230, %v204
    %v233 = vmul.f32 %v205, -1.45660715e-05
    %v234 = vmul.f32 %v206, -1.45660715e-05
    %v235 = vadd.f32 %v233, -0.00021337405
    %v236 = vadd.f32 %v234, -0.00021337405
    %v237 = vmul.f32 %v235, %v205
    %v238 = vmul.f32 %v236, %v206
    %v239 = vadd.f32 %v237, -0.001682827
    %v240 = vadd.f32 %v238, -0.001682827
    %v241 = vmul.f32 %v239, %v205
    %v242 = vmul.f32 %v240, %v206
    %v243 = vadd.f32 %v241, -0.0073733293
    %v244 = vadd.f32 %v242, -0.0073733293
    %v245 = vmul.f32 %v243, %v205
    %v246 = vmul.f32 %v244, %v206
    %v247 = vadd.f32 %v245, -0.014264739
    %v248 = vadd.f32 %v246, -0.014264739
    %v249 = vrcp.pop %v247
    %v250 = vmul.f32 %v247, %v249
    %v251 = vsub.f32 1.0, %v250
    %v252 = vmul.f32 %v249, %v251
    %v253 = vadd.f32 %v249, %v252
    %vm254 = vweird.f32 %v247
    %vm255 = vweird.f32 %v249
    %vm256 = vmor %vm254, %vm255
    %v257 = vsel %vm256, %v249, %v253
    %v258 = vand.u32 2147483647, %v247
    %vm259 = vcmp.eq.f32.partialorder %v258, 8.507059e+37
    %v260 = vand.u32 %v247, 2147483648
    %v261 = vor.u32 1.1754944e-38, %v260
    %v262 = vsel %vm259, %v261, %v257
    %v263 = vmul.f32 %v231, %v262
    %v264 = vrcp.pop %v248
    %v265 = vmul.f32 %v248, %v264
    %v266 = vsub.f32 1.0, %v265
    %v267 = vmul.f32 %v264, %v266
    %v268 = vadd.f32 %v264, %v267
    %vm269 = vweird.f32 %v248
    %vm270 = vweird.f32 %v264
    %vm271 = vmor %vm269, %vm270
    %v272 = vsel %vm271, %v264, %v268
    %v273 = vand.u32 2147483647, %v248
    %vm274 = vcmp.eq.f32.partialorder %v273, 8.507059e+37
    %v275 = vand.u32 %v248, 2147483648
    %v276 = vor.u32 1.1754944e-38, %v275
    %v277 = vsel %vm274, %v276, %v272
    %v278 = vmul.f32 %v232, %v277
    %v279 = vadd.f32 %v263, 1.0
    %v280 = vadd.f32 %v278, 1.0
    %v281 = vmul.f32 %v197, %v279
    %v282 = vmul.f32 %v198, %v280
    %v283 = vld [vmem:[#allocation9] sm:$0xff]
    %v284 = vld [vmem:[#allocation9 + $0x8] sm:$0xff]
    %v285 = vld [vmem:[#allocation9 + $0x10] sm:$0xff]
    %v286 = vld [vmem:[#allocation9 + $0x18] sm:$0xff]
    %v287 = vld [vmem:[#allocation9 + $0x20] sm:$0xff]
    %v288 = vld [vmem:[#allocation9 + $0x28] sm:$0xff]
    %v289 = vld [vmem:[#allocation9 + $0x30] sm:$0xff]
    %v290 = vld [vmem:[#allocation9 + $0x38] sm:$0xff]
    %v291 = vld [vmem:[#allocation9 + $0x40] sm:$0xff]
    %v292 = vld [vmem:[#allocation9 + $0x48] sm:$0xff]
    %v293 = vld [vmem:[#allocation9 + $0x50] sm:$0xff]
    %v294 = vld [vmem:[#allocation9 + $0x58] sm:$0xff]
    %v295 = vld [vmem:[#allocation9 + $0x60] sm:$0xff]
    %v296 = vld [vmem:[#allocation9 + $0x68] sm:$0xff]
    %v297 = vld [vmem:[#allocation9 + $0x70] sm:$0xff]
    %v298 = vld [vmem:[#allocation9 + $0x78] sm:$0xff]
    %v299 = vld [vmem:[#allocation9 + $0x80] sm:$0xff]
    %v300 = vld [vmem:[#allocation9 + $0x88] sm:$0xff]
    %v301 = vld [vmem:[#allocation9 + $0x90] sm:$0xff]
    %v302 = vld [vmem:[#allocation9 + $0x98] sm:$0xff]
    %v303 = vld [vmem:[#allocation9 + $0xa0] sm:$0xff]
    %v304 = vld [vmem:[#allocation9 + $0xa8] sm:$0xff]
    %v305 = vld [vmem:[#allocation9 + $0xb0] sm:$0xff]
    %v306 = vld [vmem:[#allocation9 + $0xb8] sm:$0xff]
    %v307 = vld [vmem:[#allocation9 + $0xc0] sm:$0xff]
    %v308 = vld [vmem:[#allocation9 + $0xc8] sm:$0xff]
    %v309 = vld [vmem:[#allocation9 + $0xd0] sm:$0xff]
    %v310 = vld [vmem:[#allocation9 + $0xd8] sm:$0xff]
    %v311 = vld [vmem:[#allocation9 + $0xe0] sm:$0xff]
    %v312 = vld [vmem:[#allocation9 + $0xe8] sm:$0xff]
    %v313 = vld [vmem:[#allocation9 + $0xf0] sm:$0xff]
    %v314 = vld [vmem:[#allocation9 + $0xf8] sm:$0xff]
    %v315 = vld [vmem:[%s6] sm:$0x1]
    %v317 = vperm.slane %v315, 0
    %319 = vmatpush.msra.mxu0 %v298
    %320 = vmatpush.msra.mxu0 %v297
    %321 = vmatpush.msra.mxu0 %v296
    %322 = vmatpush.msra.mxu0 %v295
    %323 = vmatpush.msra.mxu0 %v294
    %324 = vmatpush.msra.mxu0 %v293
    %325 = vmatpush.msra.mxu0 %v292
    %326 = vmatpush.msra.mxu0 %v291
    %327 = vmatpush.msra.mxu0 %v290
    %328 = vmatpush.msra.mxu0 %v289
    %329 = vmatpush.msra.mxu0 %v288
    %330 = vmatpush.msra.mxu0 %v287
    %331 = vmatpush.msra.mxu0 %v286
    %332 = vmatpush.msra.mxu0 %v285
    %333 = vmatpush.msra.mxu0 %v284
    %334 = vmatpush.msra.mxu0 %v283
    %335 = vmatmul.f32.gmra.mxu0 %v281
    %v336 = vpop.f32.mrf.mxu0
    %v337 = vadd.f32 %v317, %v336
    %338 = vdwg.mxu0
    %339 = vmatpush.msra.mxu0 %v314
    %340 = vmatpush.msra.mxu0 %v313
    %341 = vmatpush.msra.mxu0 %v312
    %342 = vmatpush.msra.mxu0 %v311
    %343 = vmatpush.msra.mxu0 %v310
    %344 = vmatpush.msra.mxu0 %v309
    %345 = vmatpush.msra.mxu0 %v308
    %346 = vmatpush.msra.mxu0 %v307
    %347 = vmatpush.msra.mxu0 %v306
    %348 = vmatpush.msra.mxu0 %v305
    %349 = vmatpush.msra.mxu0 %v304
    %350 = vmatpush.msra.mxu0 %v303
    %351 = vmatpush.msra.mxu0 %v302
    %352 = vmatpush.msra.mxu0 %v301
    %353 = vmatpush.msra.mxu0 %v300
    %354 = vmatpush.msra.mxu0 %v299
    %355 = vmatmul.f32.gmra.mxu0 %v282
    %v356 = vpop.f32.mrf.mxu0
    %v357 = vadd.f32 %v337, %v356
    %358 = vdwg.mxu0
    %s359 = sld [smem:[#allocation2]]
    %v360 = vstv %s359
    %v361 = vrcp.pop %v360
    %v362 = vmul.f32 %v360, %v361
    %v363 = vsub.f32 1.0, %v362
    %v364 = vmul.f32 %v361, %v363
    %v365 = vadd.f32 %v361, %v364
    %vm366 = vweird.f32 %v360
    %vm367 = vweird.f32 %v361
    %vm368 = vmor %vm366, %vm367
    %v369 = vsel %vm368, %v361, %v365
    %v370 = vand.u32 2147483647, %v360
    %vm371 = vcmp.eq.f32.partialorder %v370, 8.507059e+37
    %v372 = vand.u32 %v360, 2147483648
    %v373 = vor.u32 1.1754944e-38, %v372
    %v374 = vsel %vm371, %v373, %v369
    %s375 = vtos %v374
    %v376 = vstv %s375
    %v377 = vmul.f32 %v357, %v376
    %378 = vst [vmem:[#allocation11] sm:$0xff] %v377
    // Predicated region
    $region50: #{tpu_custom_call.1} parent=1 // pred_check
      _
    $region51: #{tpu_custom_call.1} parent=1 // pred_check_branch
      %380 = sbr.rel (0) target = $region53
    $region52: #{tpu_custom_call.1} parent=1 // pred_region
      %382 = vsyncadd [#allocation5], 0
      %s384 = sshll.u32 [#allocation11], 4
      %s385 = int_to_ptr.vmem [resolvable:$true] %s384
      %s386 = sshll.u32 %s8, 4
      %s387 = int_to_ptr.hbm [resolvable:$true] %s386
      %389 = dma.vmem_to_hbm [thread:$0]  %s385, 128, %s387, [#allocation5]
    $region53: #{tpu_custom_call.1} parent=1 // pred_fallthru
      _
    // Predicated region
    $region54: #{tpu_custom_call.1} parent=1 // pred_check
      _
    $region55: #{tpu_custom_call.1} parent=1 // pred_check_branch
      %391 = sbr.rel (0) target = $region57
    $region56: #{tpu_custom_call.1} parent=1 // pred_region
      %393 = dma.done [#allocation5], 128
    $region57: #{tpu_custom_call.1} parent=1 // pred_fallthru
      _
    %394 = vsyncpa [#allocation4], 1
    %395 = vsyncpa [#allocation7], 1
    %396 = vsyncpa [#allocation10], 1
    %397 = vsyncpa [#allocation5], 1

// kernel: tpu_custom_call.1
$region0: #{tpu_custom_call.1}
  #allocation0 [shape = 'u32[]', space=smem, size = 0x4, offset = 0x4, fixed_abs, tag = 'smem constant byte address 0x4 - core index']
  #allocation1 [shape = 'u32[72,128]{1,0:T(1,128)}', space=vmem, size = 0x9000, scoped, tag = 'internal scratch']
  #allocation2 [shape = 'f32[1,1]{1,0:T(1,128)S(6)}', space=smem, size = 0x200, scoped, tag = 'scoped memory for tpu_custom_call.1']
  %s0 = inlined_call_operand.hbm [shape: f32[8,32], index: 0, kind: input, shape index: {}]
  %s1 = inlined_call_operand.hbm [shape: f32[32,256], index: 1, kind: input, shape index: {}]
  %s2 = inlined_call_operand.vmem [shape: f32[1,256], index: 2, kind: input, shape index: {}]
  %s3 = inlined_call_operand.vmem [shape: f32[1,256], index: 3, kind: input, shape index: {}]
  %s4 = inlined_call_operand.hbm [shape: f32[1,256], index: 4, kind: input, shape index: {}]
  %s5 = inlined_call_operand.hbm [shape: f32[256,128], index: 5, kind: input, shape index: {}]
  %s6 = inlined_call_operand.vmem [shape: f32[1,128], index: 6, kind: input, shape index: {}]
  %s7 = inlined_call_operand.<no memory space> [shape: f32[1,1], index: 7, kind: input, shape index: {}]
  %s8 = inlined_call_operand.hbm [shape: f32[8,128], index: 8, kind: output, shape index: {}]
  %s9 = sld [smem:[#allocation0]]
  $region58: #{tpu_custom_call.1} parent=0
    _
  %s11 = ssub.s32 1, %s9
  %s12 = scalar_select 0, %s11, %s9
  %13 = sst [smem:[#allocation2]] %s7
  $region1: #{tpu_custom_call.1} parent=0
    #allocation3 [shape = 'u8[4096]{0}', space=vmem, size = 0x1000, scoped, tag = 'input window, operand 0, single buffered']
    #allocation4 [shape = 's32[1]{0}', space=sflag, size = 0x4, scoped, tag = 'scoped memory for tpu_custom_call.1']
    #allocation5 [shape = 's32[1]{0}', space=sflag, size = 0x4, scoped, tag = 'scoped memory for tpu_custom_call.1']
    #allocation6 [shape = 'u8[32768]{0}', space=vmem, size = 0x8000, scoped, tag = 'input window, operand 1, single buffered']
    #allocation7 [shape = 's32[1]{0}', space=sflag, size = 0x4, scoped, tag = 'scoped memory for tpu_custom_call.1']
    #allocation8 [shape = 'u8[1024]{0}', space=vmem, size = 0x400, scoped, tag = 'input window, operand 4, single buffered']
    #allocation9 [shape = 'u8[131072]{0}', space=vmem, size = 0x20000, scoped, tag = 'input window, operand 5, single buffered']
    #allocation10 [shape = 's32[1]{0}', space=sflag, size = 0x4, scoped, tag = 'scoped memory for tpu_custom_call.1']
    #allocation11 [shape = 'u8[4096]{0}', space=vmem, size = 0x1000, scoped, tag = 'output window, operand 0, single buffered']
    %14 = vsyncpa [#allocation4], 0
    %15 = vsyncpa [#allocation7], 0
    %16 = vsyncpa [#allocation10], 0
    %17 = vsyncpa [#allocation5], 0
    // Predicated region
    $region2: #{tpu_custom_call.1} parent=1 // pred_check
      _
    $region3: #{tpu_custom_call.1} parent=1 // pred_check_branch
      %19 = sbr.rel (0) target = $region5
    $region4: #{tpu_custom_call.1} parent=1 // pred_region
      %21 = vsyncadd [#allocation4], 0
      %s23 = sshll.u32 %s0, 4
      %s24 = int_to_ptr.hbm [resolvable:$true] %s23
      %s25 = sshll.u32 [#allocation3], 4
      %s26 = int_to_ptr.vmem [resolvable:$true] %s25
      %28 = dma.hbm_to_vmem [thread:$0]  %s24, 128, %s26, [#allocation4]
    $region5: #{tpu_custom_call.1} parent=1 // pred_fallthru
      _
    // Predicated region
    $region6: #{tpu_custom_call.1} parent=1 // pred_check
      _
    $region7: #{tpu_custom_call.1} parent=1 // pred_check_branch
      %30 = sbr.rel (0) target = $region9
    $region8: #{tpu_custom_call.1} parent=1 // pred_region
      %32 = vsyncadd [#allocation7], 0
      %s33 = sshll.u32 %s1, 4
      %s34 = int_to_ptr.hbm [resolvable:$true] %s33
      %s35 = sshll.u32 [#allocation6], 4
      %s36 = int_to_ptr.vmem [resolvable:$true] %s35
      %41 = dma.hbm_to_vmem [thread:$0]  %s34, 1024, %s36, [#allocation7], 256, 256, 16
    $region9: #{tpu_custom_call.1} parent=1 // pred_fallthru
      _
    // Predicated region
    $region10: #{tpu_custom_call.1} parent=1 // pred_check
      _
    $region11: #{tpu_custom_call.1} parent=1 // pred_check_branch
      %43 = sbr.rel (0) target = $region13
    $region12: #{tpu_custom_call.1} parent=1 // pred_region
      _
    $region13: #{tpu_custom_call.1} parent=1 // pred_fallthru
      _
    // Predicated region
    $region14: #{tpu_custom_call.1} parent=1 // pred_check
      _
    $region15: #{tpu_custom_call.1} parent=1 // pred_check_branch
      %45 = sbr.rel (0) target = $region17
    $region16: #{tpu_custom_call.1} parent=1 // pred_region
      _
    $region17: #{tpu_custom_call.1} parent=1 // pred_fallthru
      _
    // Predicated region
    $region18: #{tpu_custom_call.1} parent=1 // pred_check
      _
    $region19: #{tpu_custom_call.1} parent=1 // pred_check_branch
      %47 = sbr.rel (0) target = $region21
    $region20: #{tpu_custom_call.1} parent=1 // pred_region
      %49 = vsyncadd [#allocation7], 0
      %s51 = sshll.u32 %s4, 4
      %s52 = int_to_ptr.hbm [resolvable:$true] %s51
      %s53 = sshll.u32 [#allocation8], 4
      %s54 = int_to_ptr.vmem [resolvable:$true] %s53
      %56 = dma.hbm_to_vmem [thread:$0]  %s52, 32, %s54, [#allocation7]
    $region21: #{tpu_custom_call.1} parent=1 // pred_fallthru
      _
    // Predicated region
    $region22: #{tpu_custom_call.1} parent=1 // pred_check
      _
    $region23: #{tpu_custom_call.1} parent=1 // pred_check_branch
      %58 = sbr.rel (0) target = $region25
    $region24: #{tpu_custom_call.1} parent=1 // pred_region
      %60 = vsyncadd [#allocation10], 0
      %s61 = sshll.u32 %s5, 4
      %s62 = int_to_ptr.hbm [resolvable:$true] %s61
      %s63 = sshll.u32 [#allocation9], 4
      %s64 = int_to_ptr.vmem [resolvable:$true] %s63
      %69 = dma.hbm_to_vmem [thread:$0]  %s62, 4096, %s64, [#allocation10], 128, 128, 8
    $region25: #{tpu_custom_call.1} parent=1 // pred_fallthru
      _
    // Predicated region
    $region26: #{tpu_custom_call.1} parent=1 // pred_check
      _
    $region27: #{tpu_custom_call.1} parent=1 // pred_check_branch
      %71 = sbr.rel (0) target = $region29
    $region28: #{tpu_custom_call.1} parent=1 // pred_region
      _
    $region29: #{tpu_custom_call.1} parent=1 // pred_fallthru
      _
    // Predicated region
    $region30: #{tpu_custom_call.1} parent=1 // pred_check
      _
    $region31: #{tpu_custom_call.1} parent=1 // pred_check_branch
      %73 = sbr.rel (0) target = $region33
    $region32: #{tpu_custom_call.1} parent=1 // pred_region
      _
    $region33: #{tpu_custom_call.1} parent=1 // pred_fallthru
      _
    // Predicated region
    $region34: #{tpu_custom_call.1} parent=1 // pred_check
      _
    $region35: #{tpu_custom_call.1} parent=1 // pred_check_branch
      %75 = sbr.rel (0) target = $region37
    $region36: #{tpu_custom_call.1} parent=1 // pred_region
      %77 = dma.done [#allocation4], 128
    $region37: #{tpu_custom_call.1} parent=1 // pred_fallthru
      _
    // Predicated region
    $region38: #{tpu_custom_call.1} parent=1 // pred_check
      _
    $region39: #{tpu_custom_call.1} parent=1 // pred_check_branch
      %79 = sbr.rel (0) target = $region41
    $region40: #{tpu_custom_call.1} parent=1 // pred_region
      %81 = dma.done [#allocation7], 1024
    $region41: #{tpu_custom_call.1} parent=1 // pred_fallthru
      _
    // Predicated region
    $region42: #{tpu_custom_call.1} parent=1 // pred_check
      _
    $region43: #{tpu_custom_call.1} parent=1 // pred_check_branch
      %83 = sbr.rel (0) target = $region45
    $region44: #{tpu_custom_call.1} parent=1 // pred_region
      %85 = dma.done [#allocation7], 32
    $region45: #{tpu_custom_call.1} parent=1 // pred_fallthru
      _
    // Predicated region
    $region46: #{tpu_custom_call.1} parent=1 // pred_check
      _
    $region47: #{tpu_custom_call.1} parent=1 // pred_check_branch
      %87 = sbr.rel (0) target = $region49
    $region48: #{tpu_custom_call.1} parent=1 // pred_region
      %89 = dma.done [#allocation10], 4096
    $region49: #{tpu_custom_call.1} parent=1 // pred_fallthru
      _
    %v90 = vld [vmem:[#allocation3] sm:$0xff]
    %v91 = vld [vmem:[#allocation6] sm:$0xff]
    %v92 = vld [vmem:[#allocation6 + $0x8] sm:$0xff]
    %v93 = vld [vmem:[#allocation6 + $0x10] sm:$0xff]
    %v94 = vld [vmem:[#allocation6 + $0x18] sm:$0xff]
    %v95 = vld [vmem:[#allocation6 + $0x20] sm:$0xff]
    %v96 = vld [vmem:[#allocation6 + $0x28] sm:$0xff]
    %v97 = vld [vmem:[#allocation6 + $0x30] sm:$0xff]
    %v98 = vld [vmem:[#allocation6 + $0x38] sm:$0xff]
    %v99 = vld [vmem:[%s2] sm:$0x3]
    %v101 = vperm.slane %v99, 0
    %v102 = vperm.slane %v99, 1
    %vm105 = vcmask 261120
    %v107 = vsel %vm105, %v90, 0
    %109 = vmatpush.msra.mxu0 0.0
    %110 = vmatpush.msra.mxu0 0.0
    %111 = vmatpush.msra.mxu0 0.0
    %112 = vmatpush.msra.mxu0 0.0
    %113 = vmatpush.msra.mxu0 0.0
    %114 = vmatpush.msra.mxu0 0.0
    %115 = vmatpush.msra.mxu0 0.0
    %116 = vmatpush.msra.mxu0 0.0
    %117 = vmatpush.msra.mxu0 0.0
    %118 = vmatpush.msra.mxu0 0.0
    %119 = vmatpush.msra.mxu0 0.0
    %120 = vmatpush.msra.mxu0 0.0
    %121 = vmatpush.msra.mxu0 %v97
    %122 = vmatpush.msra.mxu0 %v95
    %123 = vmatpush.msra.mxu0 %v93
    %124 = vmatpush.msra.mxu0 %v91
    %125 = vmatmul.f32.gmra.mxu0 %v107
    %v126 = vpop.f32.mrf.mxu0
    %v127 = vadd.f32 %v101, %v126
    %128 = vdwg.mxu0
    %129 = vmatpush.msra.mxu0 0.0
    %130 = vmatpush.msra.mxu0 0.0
    %131 = vmatpush.msra.mxu0 0.0
    %132 = vmatpush.msra.mxu0 0.0
    %133 = vmatpush.msra.mxu0 0.0
    %134 = vmatpush.msra.mxu0 0.0
    %135 = vmatpush.msra.mxu0 0.0
    %136 = vmatpush.msra.mxu0 0.0
    %137 = vmatpush.msra.mxu0 0.0
    %138 = vmatpush.msra.mxu0 0.0
    %139 = vmatpush.msra.mxu0 0.0
    %140 = vmatpush.msra.mxu0 0.0
    %141 = vmatpush.msra.mxu0 %v98
    %142 = vmatpush.msra.mxu0 %v96
    %143 = vmatpush.msra.mxu0 %v94
    %144 = vmatpush.msra.mxu0 %v92
    %145 = vmatmul.f32.gmra.mxu0 %v107
    %v146 = vpop.f32.mrf.mxu0
    %v147 = vadd.f32 %v102, %v146
    %148 = vdwg.mxu0
    %v149 = vadd.f32 %v127, %v147
    %150 = vadd.xlane.f32.xlu0 %v149
    %v151 = vpop.xlane.xlu0 %150
    %v152 = vrcp.pop 256.0
    %v153 = vmul.f32 256.0, %v152
    %v154 = vsub.f32 1.0, %v153
    %v155 = vmul.f32 %v152, %v154
    %v156 = vadd.f32 %v152, %v155
    %vm157 = vweird.f32 %v152
    %v158 = vsel %vm157, %v152, %v156
    %v159 = vmul.f32 %v151, %v158
    %v160 = vsub.f32 %v127, %v159
    %v161 = vsub.f32 %v147, %v159
    %v162 = vmul.f32 %v160, %v160
    %v163 = vmul.f32 %v161, %v161
    %v164 = vadd.f32 %v162, %v163
    %165 = vadd.xlane.f32.xlu0 %v164
    %v166 = vpop.xlane.xlu0 %165
    %v167 = vmul.f32 %v166, %v158
    %v168 = vadd.f32 %v167, 1e-05
    %v169 = vrsqrt.pop %v168
    %v170 = vmul.f32 %v169, %v168
    %v171 = vmul.f32 %v170, %v169
    %v172 = vmul.f32 0.5, %v171
    %v173 = vsub.f32 1.5, %v172
    %v174 = vmul.f32 %v169, %v173
    %vm175 = vweird.f32 %v168
    %vm176 = vweird.f32 %v169
    %vm177 = vmor %vm175, %vm176
    %v178 = vsel %vm177, %v169, %v174
    %v179 = vmul.f32 %v160, %v178
    %v180 = vmul.f32 %v161, %v178
    %v181 = vld [vmem:[%s3] sm:$0x3]
    %v183 = vperm.slane %v181, 0
    %v184 = vperm.slane %v181, 1
    %v187 = vmul.f32 %v179, %v183
    %v188 = vmul.f32 %v180, %v184
    %v189 = vld [vmem:[#allocation8] sm:$0x3]
    %v191 = vperm.slane %v189, 0
    %v192 = vperm.slane %v189, 1
    %v195 = vadd.f32 %v187, %v191
    %v196 = vadd.f32 %v188, %v192
    %v197 = vmul.f32 %v195, 0.5
    %v198 = vmul.f32 %v196, 0.5
    %v199 = vmul.f32 %v195, 0.70710677
    %v200 = vmul.f32 %v196, 0.70710677
    %v201 = vmax.f32 %v199, -4.0
    %v202 = vmax.f32 %v200, -4.0
    %v203 = vmin.f32 %v201, 4.0
    %v204 = vmin.f32 %v202, 4.0
    %v205 = vmul.f32 %v203, %v203
    %v206 = vmul.f32 %v204, %v204
    %v207 = vmul.f32 %v205, -2.7261424e-10
    %v208 = vmul.f32 %v206, -2.7261424e-10
    %v209 = vadd.f32 %v207, 2.7706815e-08
    %v210 = vadd.f32 %v208, 2.7706815e-08
    %v211 = vmul.f32 %v209, %v205
    %v212 = vmul.f32 %v210, %v206
    %v213 = vadd.f32 %v211, -2.101024e-06
    %v214 = vadd.f32 %v212, -2.101024e-06
    %v215 = vmul.f32 %v213, %v205
    %v216 = vmul.f32 %v214, %v206
    %v217 = vadd.f32 %v215, -5.6925062e-05
    %v218 = vadd.f32 %v216, -5.6925062e-05
    %v219 = vmul.f32 %v217, %v205
    %v220 = vmul.f32 %v218, %v206
    %v221 = vadd.f32 %v219, -0.00073499064
    %v222 = vadd.f32 %v220, -0.00073499064
    %v223 = vmul.f32 %v221, %v205
    %v224 = vmul.f32 %v222, %v206
    %v225 = vadd.f32 %v223, -0.0029546
    %v226 = vadd.f32 %v224, -0.0029546
    %v227 = vmul.f32 %v225, %v205
    %v228 = vmul.f32 %v226, %v206
    %v229 = vadd.f32 %v227, -0.016096033
    %v230 = vadd.f32 %v228, -0.016096033
    %v231 = vmul.f32 %v229, %v203
    %v232 = vmul.f32 %v230, %v204
    %v233 = vmul.f32 %v205, -1.45660715e-05
    %v234 = vmul.f32 %v206, -1.45660715e-05
    %v235 = vadd.f32 %v233, -0.00021337405
    %v236 = vadd.f32 %v234, -0.00021337405
    %v237 = vmul.f32 %v235, %v205
    %v238 = vmul.f32 %v236, %v206
    %v239 = vadd.f32 %v237, -0.001682827
    %v240 = vadd.f32 %v238, -0.001682827
    %v241 = vmul.f32 %v239, %v205
    %v242 = vmul.f32 %v240, %v206
    %v243 = vadd.f32 %v241, -0.0073733293
    %v244 = vadd.f32 %v242, -0.0073733293
    %v245 = vmul.f32 %v243, %v205
    %v246 = vmul.f32 %v244, %v206
    %v247 = vadd.f32 %v245, -0.014264739
    %v248 = vadd.f32 %v246, -0.014264739
    %v249 = vrcp.pop %v247
    %v250 = vmul.f32 %v247, %v249
    %v251 = vsub.f32 1.0, %v250
    %v252 = vmul.f32 %v249, %v251
    %v253 = vadd.f32 %v249, %v252
    %vm254 = vweird.f32 %v247
    %vm255 = vweird.f32 %v249
    %vm256 = vmor %vm254, %vm255
    %v257 = vsel %vm256, %v249, %v253
    %v258 = vand.u32 2147483647, %v247
    %vm259 = vcmp.eq.f32.partialorder %v258, 8.507059e+37
    %v260 = vand.u32 %v247, 2147483648
    %v261 = vor.u32 1.1754944e-38, %v260
    %v262 = vsel %vm259, %v261, %v257
    %v263 = vmul.f32 %v231, %v262
    %v264 = vrcp.pop %v248
    %v265 = vmul.f32 %v248, %v264
    %v266 = vsub.f32 1.0, %v265
    %v267 = vmul.f32 %v264, %v266
    %v268 = vadd.f32 %v264, %v267
    %vm269 = vweird.f32 %v248
    %vm270 = vweird.f32 %v264
    %vm271 = vmor %vm269, %vm270
    %v272 = vsel %vm271, %v264, %v268
    %v273 = vand.u32 2147483647, %v248
    %vm274 = vcmp.eq.f32.partialorder %v273, 8.507059e+37
    %v275 = vand.u32 %v248, 2147483648
    %v276 = vor.u32 1.1754944e-38, %v275
    %v277 = vsel %vm274, %v276, %v272
    %v278 = vmul.f32 %v232, %v277
    %v279 = vadd.f32 %v263, 1.0
    %v280 = vadd.f32 %v278, 1.0
    %v281 = vmul.f32 %v197, %v279
    %v282 = vmul.f32 %v198, %v280
    %v283 = vld [vmem:[#allocation9] sm:$0xff]
    %v284 = vld [vmem:[#allocation9 + $0x8] sm:$0xff]
    %v285 = vld [vmem:[#allocation9 + $0x10] sm:$0xff]
    %v286 = vld [vmem:[#allocation9 + $0x18] sm:$0xff]
    %v287 = vld [vmem:[#allocation9 + $0x20] sm:$0xff]
    %v288 = vld [vmem:[#allocation9 + $0x28] sm:$0xff]
    %v289 = vld [vmem:[#allocation9 + $0x30] sm:$0xff]
    %v290 = vld [vmem:[#allocation9 + $0x38] sm:$0xff]
    %v291 = vld [vmem:[#allocation9 + $0x40] sm:$0xff]
    %v292 = vld [vmem:[#allocation9 + $0x48] sm:$0xff]
    %v293 = vld [vmem:[#allocation9 + $0x50] sm:$0xff]
    %v294 = vld [vmem:[#allocation9 + $0x58] sm:$0xff]
    %v295 = vld [vmem:[#allocation9 + $0x60] sm:$0xff]
    %v296 = vld [vmem:[#allocation9 + $0x68] sm:$0xff]
    %v297 = vld [vmem:[#allocation9 + $0x70] sm:$0xff]
    %v298 = vld [vmem:[#allocation9 + $0x78] sm:$0xff]
    %v299 = vld [vmem:[#allocation9 + $0x80] sm:$0xff]
    %v300 = vld [vmem:[#allocation9 + $0x88] sm:$0xff]
    %v301 = vld [vmem:[#allocation9 + $0x90] sm:$0xff]
    %v302 = vld [vmem:[#allocation9 + $0x98] sm:$0xff]
    %v303 = vld [vmem:[#allocation9 + $0xa0] sm:$0xff]
    %v304 = vld [vmem:[#allocation9 + $0xa8] sm:$0xff]
    %v305 = vld [vmem:[#allocation9 + $0xb0] sm:$0xff]
    %v306 = vld [vmem:[#allocation9 + $0xb8] sm:$0xff]
    %v307 = vld [vmem:[#allocation9 + $0xc0] sm:$0xff]
    %v308 = vld [vmem:[#allocation9 + $0xc8] sm:$0xff]
    %v309 = vld [vmem:[#allocation9 + $0xd0] sm:$0xff]
    %v310 = vld [vmem:[#allocation9 + $0xd8] sm:$0xff]
    %v311 = vld [vmem:[#allocation9 + $0xe0] sm:$0xff]
    %v312 = vld [vmem:[#allocation9 + $0xe8] sm:$0xff]
    %v313 = vld [vmem:[#allocation9 + $0xf0] sm:$0xff]
    %v314 = vld [vmem:[#allocation9 + $0xf8] sm:$0xff]
    %v315 = vld [vmem:[%s6] sm:$0x1]
    %v317 = vperm.slane %v315, 0
    %319 = vmatpush.msra.mxu0 %v298
    %320 = vmatpush.msra.mxu0 %v297
    %321 = vmatpush.msra.mxu0 %v296
    %322 = vmatpush.msra.mxu0 %v295
    %323 = vmatpush.msra.mxu0 %v294
    %324 = vmatpush.msra.mxu0 %v293
    %325 = vmatpush.msra.mxu0 %v292
    %326 = vmatpush.msra.mxu0 %v291
    %327 = vmatpush.msra.mxu0 %v290
    %328 = vmatpush.msra.mxu0 %v289
    %329 = vmatpush.msra.mxu0 %v288
    %330 = vmatpush.msra.mxu0 %v287
    %331 = vmatpush.msra.mxu0 %v286
    %332 = vmatpush.msra.mxu0 %v285
    %333 = vmatpush.msra.mxu0 %v284
    %334 = vmatpush.msra.mxu0 %v283
    %335 = vmatmul.f32.gmra.mxu0 %v281
    %v336 = vpop.f32.mrf.mxu0
    %v337 = vadd.f32 %v317, %v336
    %338 = vdwg.mxu0
    %339 = vmatpush.msra.mxu0 %v314
    %340 = vmatpush.msra.mxu0 %v313
    %341 = vmatpush.msra.mxu0 %v312
    %342 = vmatpush.msra.mxu0 %v311
    %343 = vmatpush.msra.mxu0 %v310
    %344 = vmatpush.msra.mxu0 %v309
    %345 = vmatpush.msra.mxu0 %v308
    %346 = vmatpush.msra.mxu0 %v307
    %347 = vmatpush.msra.mxu0 %v306
    %348 = vmatpush.msra.mxu0 %v305
    %349 = vmatpush.msra.mxu0 %v304
    %350 = vmatpush.msra.mxu0 %v303
    %351 = vmatpush.msra.mxu0 %v302
    %352 = vmatpush.msra.mxu0 %v301
    %353 = vmatpush.msra.mxu0 %v300
    %354 = vmatpush.msra.mxu0 %v299
    %355 = vmatmul.f32.gmra.mxu0 %v282
    %v356 = vpop.f32.mrf.mxu0
    %v357 = vadd.f32 %v337, %v356
    %358 = vdwg.mxu0
    %s359 = sld [smem:[#allocation2]]
    %v360 = vstv %s359
    %v361 = vrcp.pop %v360
    %v362 = vmul.f32 %v360, %v361
    %v363 = vsub.f32 1.0, %v362
    %v364 = vmul.f32 %v361, %v363
    %v365 = vadd.f32 %v361, %v364
    %vm366 = vweird.f32 %v360
    %vm367 = vweird.f32 %v361
    %vm368 = vmor %vm366, %vm367
    %v369 = vsel %vm368, %v361, %v365
    %v370 = vand.u32 2147483647, %v360
    %vm371 = vcmp.eq.f32.partialorder %v370, 8.507059e+37
    %v372 = vand.u32 %v360, 2147483648
    %v373 = vor.u32 1.1754944e-38, %v372
    %v374 = vsel %vm371, %v373, %v369
    %s375 = vtos %v374
    %v376 = vstv %s375
    %v377 = vmul.f32 %v357, %v376
    %378 = vst [vmem:[#allocation11] sm:$0xff] %v377
    // Predicated region
    $region50: #{tpu_custom_call.1} parent=1 // pred_check
      _
    $region51: #{tpu_custom_call.1} parent=1 // pred_check_branch
      %380 = sbr.rel (0) target = $region53
    $region52: #{tpu_custom_call.1} parent=1 // pred_region
      %382 = vsyncadd [#allocation5], 0
      %s384 = sshll.u32 [#allocation11], 4
      %s385 = int_to_ptr.vmem [resolvable:$true] %s384
      %s386 = sshll.u32 %s8, 4
      %s387 = int_to_ptr.hbm [resolvable:$true] %s386
      %389 = dma.vmem_to_hbm [thread:$0]  %s385, 128, %s387, [#allocation5]
    $region53: #{tpu_custom_call.1} parent=1 // pred_fallthru
      _
    // Predicated region
    $region54: #{tpu_custom_call.1} parent=1 // pred_check
      _
    $region55: #{tpu_custom_call.1} parent=1 // pred_check_branch
      %391 = sbr.rel (0) target = $region57
    $region56: #{tpu_custom_call.1} parent=1 // pred_region
      %393 = dma.done [#allocation5], 128
    $region57: #{tpu_custom_call.1} parent=1 // pred_fallthru
      _
    %394 = vsyncpa [#allocation4], 1
    %395 = vsyncpa [#allocation7], 1
    %396 = vsyncpa [#allocation10], 1
    %397 = vsyncpa [#allocation5], 1

</llo_original>
